<compile_context>
chip_gen: v6e
topology: v6e:2x2x1
jax: 0.10.0
libtpu: 0.0.40
codegen_flags: <defaults>
</compile_context>

<pallas_src>
import jax
import jax.numpy as jnp
import numpy as np
from jax.experimental import pallas as pl
from jax.experimental.pallas import tpu as pltpu

VOCAB = 16
EMBED_DIM = 32          # embedding_dim
ENCODE_DIM = 32         # encode_dim (must equal embedding_dim, as in ASTNN)
LANE = 128              # feature dims zero-padded to 128 lanes (lane-dense MXU/stores)
SUB = 8                 # sublane multiple
KP = 128                # padded row count of the fused token table (>= VOCAB + 1)


def _round_up(n, m):
    return ((n + m - 1) // m) * m


# ---------------------------------------------------------------------------
# Trace-time traversal: collect the static schedule (post-order over "levels").
# Mirrors traverse_mul's bookkeeping exactly (including its quirks).
# ---------------------------------------------------------------------------
def build_schedule(node, batch_size):
    groups = []  # post-order: children groups always precede their parent

    def rec(node, batch_index):
        size = len(node)
        if not size:
            return None
        bidx = list(batch_index)
        index, children_index, current_node, children = [], [], [], []
        for i in range(size):
            if node[i][0] != -1:
                index.append(i)
                current_node.append(node[i][0])
                temp = node[i][1:]
                for j in range(len(temp)):
                    if temp[j][0] != -1:
                        if len(children_index) <= j:
                            children_index.append([i])
                            children.append([temp[j]])
                        else:
                            children_index[j].append(i)
                            children[j].append(temp[j])
            else:
                bidx[i] = -1
        child_specs = []
        for c in range(len(children)):
            bci = [bidx[i] for i in children_index[c]]
            gid = rec(children[c], bci)
            if gid is not None:
                child_specs.append((gid, tuple(children_index[c])))
        b_in = tuple(b for b in bidx if b != -1)
        groups.append(dict(size=size,
                           index=tuple(index),
                           tokens=tuple(current_node),
                           children=tuple(child_specs),
                           b_in=b_in))
        return len(groups) - 1

    rec(node, list(range(batch_size)))
    return groups


# ---------------------------------------------------------------------------
# Fused Pallas kernel: one token-table matmul, one tiny matmul per tree edge,
# one tiny matmul + running max per level, one dense output store.
# ---------------------------------------------------------------------------
def make_fused_kernel(offs, rows, edges, n_groups):
    n_edges = len(edges)

    def kernel(*refs):
        tb_ref, stok_ref = refs[0], refs[1]
        edge_refs = refs[2:2 + n_edges]
        g_refs = refs[2 + n_edges:2 + n_edges + n_groups]
        o_ref = refs[2 + n_edges + n_groups]
        cur = refs[2 + n_edges + n_groups + 1]          # VMEM scratch (t_pad, 128)

        # 1) embedding gather + W_c + bias for every group row in ONE MXU matmul.
        #    Real rows select T[token] = emb@W_c + b_c; dummy (-1) rows select
        #    row VOCAB = b_c (== W_c(0)); padding rows select nothing -> exact 0.
        cur[...] = jnp.dot(stok_ref[...], tb_ref[...],
                           preferred_element_type=jnp.float32)

        # 2) children scatter-add (the recursion).  Groups are in post-order, so
        #    every child group is final before its parent's edge is applied.
        #    Each edge is a full-8-sublane-tile RMW fed by a tiny 0/1 matmul.
        for e in range(n_edges):
            g, cg = edges[e]
            po, pr = offs[g], rows[g]
            co, cr = offs[cg], rows[cg]
            cur[po:po + pr, :] = cur[po:po + pr, :] + jnp.dot(
                edge_refs[e][...], cur[co:co + cr, :],
                preferred_element_type=jnp.float32)

        # 3) node_list scatter + torch.max over levels.  Level g's node_list
        #    entry is exactly G_g @ cur[group_g]  (absent batch rows contribute
        #    zero rows; the ASTNN cur[:len(b_in)] quirk is baked into G_g).
        #    Running max stays in vregs; o_ref gets ONE dense (8,128) store.
        acc = jnp.dot(g_refs[0][...], cur[offs[0]:offs[0] + rows[0], :],
                      preferred_element_type=jnp.float32)
        for g in range(1, n_groups):
            acc = jnp.maximum(acc, jnp.dot(
                g_refs[g][...], cur[offs[g]:offs[g] + rows[g], :],
                preferred_element_type=jnp.float32))
        o_ref[...] = acc

    return kernel


def tree_encoder_forward(x, bs, params):
    emb_table, w_c, b_c = params
    groups = build_schedule(x, bs)
    n_groups = len(groups)

    # Per-group padded row counts and cumulative offsets (tight slab layout).
    rows = [_round_up(max(g['size'], 1), SUB) for g in groups]
    offs, t_pad = [], 0
    for r in rows:
        offs.append(t_pad)
        t_pad += r
    b_pad = _round_up(max(bs, 1), SUB)

    # Fused token table T: row tok = emb[tok] @ W_c + b_c ; row VOCAB = b_c
    # (what W_c produces for a dummy/-1 row); zero-padded to (KP, LANE).
    assert VOCAB + 1 <= KP
    T = emb_table @ w_c + b_c                                   # (VOCAB, ENCODE_DIM)
    tb = jnp.zeros((KP, LANE), jnp.float32)
    tb = tb.at[:VOCAB, :ENCODE_DIM].set(T)
    tb = tb.at[VOCAB, :ENCODE_DIM].set(b_c[0])

    # Static 0/1 schedule matrices (built once with numpy at trace time).
    s_tok = np.zeros((t_pad, KP), np.float32)     # row -> token-table row selector
    edges, edge_mats, g_mats = [], [], []
    for g, grp in enumerate(groups):
        off = offs[g]
        real = set(grp['index'])
        for k, row in enumerate(grp['index']):
            s_tok[off + row, grp['tokens'][k]] = 1.0
        for i in range(grp['size']):
            if i not in real:
                s_tok[off + i, VOCAB] = 1.0       # dummy node -> W_c(0) = b_c
        for (cg, cidx) in grp['children']:        # one 0/1 matrix per tree edge group
            E = np.zeros((rows[g], rows[cg]), np.float32)
            for k, prow in enumerate(cidx):
                E[prow, k] = 1.0
            edges.append((g, cg))
            edge_mats.append(E)
        G = np.zeros((b_pad, rows[g]), np.float32)  # node_list scatter for this level
        for k, b in enumerate(grp['b_in']):
            G[b, k] = 1.0
        g_mats.append(G)

    kernel = make_fused_kernel(offs, rows, edges, n_groups)
    operands = [tb, jnp.asarray(s_tok)] \
        + [jnp.asarray(E) for E in edge_mats] \
        + [jnp.asarray(G) for G in g_mats]

    out_pad = pl.pallas_call(
        kernel,
        out_shape=jax.ShapeDtypeStruct((b_pad, LANE), jnp.float32),
        in_specs=[pl.BlockSpec(memory_space=pltpu.MemorySpace.VMEM)] * len(operands),
        out_specs=pl.BlockSpec(memory_space=pltpu.MemorySpace.VMEM),
        scratch_shapes=[pltpu.VMEM((t_pad, LANE), jnp.float32)],   # per-level batch_current
        compiler_params=pltpu.CompilerParams(vmem_limit_bytes=32 * 1024 * 1024),
    )(*operands)
    return out_pad[:bs, :ENCODE_DIM]


# ---------------------------------------------------------------------------
# Pure-JAX reference (mirrors the original PyTorch traverse_mul / forward,
# including the node_list cur[:len(b_in)] index_copy quirk).
# ---------------------------------------------------------------------------
def reference_forward(x, bs, params):
    emb_table, w_c, b_c = params
    node_list = []

    def rec(node, batch_index):
        size = len(node)
        if not size:
            return None
        bidx = list(batch_index)
        index, children_index, current_node, children = [], [], [], []
        for i in range(size):
            if node[i][0] != -1:
                index.append(i)
                current_node.append(node[i][0])
                temp = node[i][1:]
                for j in range(len(temp)):
                    if temp[j][0] != -1:
                        if len(children_index) <= j:
                            children_index.append([i])
                            children.append([temp[j]])
                        else:
                            children_index[j].append(i)
                            children[j].append(temp[j])
            else:
                bidx[i] = -1
        xcur = jnp.zeros((size, EMBED_DIM), jnp.float32)
        if index:
            xcur = xcur.at[jnp.asarray(index, jnp.int32)].set(
                emb_table[jnp.asarray(current_node, jnp.int32)])
        cur = xcur @ w_c + b_c
        for c in range(len(children)):
            bci = [bidx[i] for i in children_index[c]]
            tree = rec(children[c], bci)
            if tree is not None:
                cur = cur.at[jnp.asarray(children_index[c], jnp.int32)].add(tree)
        b_in = [v for v in bidx if v != -1]
        bn = jnp.zeros((bs, ENCODE_DIM), jnp.float32)
        if b_in:
            bn = bn.at[jnp.asarray(b_in, jnp.int32)].set(cur[: len(b_in)])
        node_list.append(bn)
        return cur

    rec(x, list(range(bs)))
    return jnp.max(jnp.stack(node_list), axis=0)


# --------------------------------- main -------------------------------------
if __name__ == "__main__":
    key = jax.random.PRNGKey(0)
    k1, k2, k3 = jax.random.split(key, 3)
    emb_table = (0.1 * jax.random.normal(k1, (VOCAB, EMBED_DIM))).astype(jnp.float32)
    # torch nn.Linear weight is (out, in); stored here transposed as (in, out) for x @ W
    w_c = (0.1 * jax.random.normal(k2, (EMBED_DIM, ENCODE_DIM))).astype(jnp.float32)
    b_c = (0.1 * jax.random.normal(k3, (1, ENCODE_DIM))).astype(jnp.float32)
    params = (emb_table, w_c, b_c)

    # batch of 2 small trees: nested lists [token, child, child, ...]; -1 = stop
    x = [
        [3, [5, [7]], [2]],
        [1, [4], [6, [8], [9]]],
    ]
    bs = 2

    out = tree_encoder_forward(x, bs, params)
    out = jax.block_until_ready(out)

    ref = reference_forward(x, bs, params)

    assert out.shape == (bs, ENCODE_DIM)
    # Tolerance leaves headroom for possible bf16-pass rounding inside the MXU's
    # f32 matmul path (values are O(0.1-0.5)); structure errors would be >> this.
    assert bool(jnp.allclose(out, ref, atol=5e-3)), "Pallas output mismatch vs reference"
    print("KERNEL_OK")
</pallas_src>

<mosaic_0001>
module attributes {stable_mosaic.version = 11 : i64} {
  func.func @kernel(%arg0: memref<128x128xf32, #tpu.memory_space<vmem>>, %arg1: memref<48x128xf32, #tpu.memory_space<vmem>>, %arg2: memref<8x8xf32, #tpu.memory_space<vmem>>, %arg3: memref<8x8xf32, #tpu.memory_space<vmem>>, %arg4: memref<8x8xf32, #tpu.memory_space<vmem>>, %arg5: memref<8x8xf32, #tpu.memory_space<vmem>>, %arg6: memref<8x8xf32, #tpu.memory_space<vmem>>, %arg7: memref<8x8xf32, #tpu.memory_space<vmem>>, %arg8: memref<8x8xf32, #tpu.memory_space<vmem>>, %arg9: memref<8x8xf32, #tpu.memory_space<vmem>>, %arg10: memref<8x8xf32, #tpu.memory_space<vmem>>, %arg11: memref<8x8xf32, #tpu.memory_space<vmem>>, %arg12: memref<8x8xf32, #tpu.memory_space<vmem>>, %arg13: memref<8x128xf32, #tpu.memory_space<vmem>>, %arg14: memref<48x128xf32, #tpu.memory_space<vmem>>) attributes {dimension_semantics = [], scalar_prefetch = 0 : i64, scratch_operands = 1 : i64, tpu.core_type = #tpu.core_type<tc>} {
    %c0 = arith.constant 0 : index
    %c0_0 = arith.constant 0 : index
    %0 = vector.load %arg1[%c0, %c0_0] : memref<48x128xf32, #tpu.memory_space<vmem>>, vector<48x128xf32>
    %c0_1 = arith.constant 0 : index
    %c0_2 = arith.constant 0 : index
    %1 = vector.load %arg0[%c0_1, %c0_2] : memref<128x128xf32, #tpu.memory_space<vmem>>, vector<128x128xf32>
    %cst = arith.constant dense<0.000000e+00> : vector<48x128xf32>
    %2 = tpu.matmul %0, %1, %cst {dimension_numbers = #tpu.dot_dimension_numbers<[1], [0], [0], [1], [0, 0, 1, 1], [], []>} : vector<48x128xf32>, vector<128x128xf32>, vector<48x128xf32> -> vector<48x128xf32>
    %c0_3 = arith.constant 0 : index
    %c0_4 = arith.constant 0 : index
    %3 = vector.load %arg14[%c0_3, %c0_4] : memref<48x128xf32, #tpu.memory_space<vmem>>, vector<48x128xf32>
    tpu.vector_store %arg14[%c0_3, %c0_4], %2 {strides = array<i32>} : memref<48x128xf32, #tpu.memory_space<vmem>>, vector<48x128xf32>,
    %c8 = arith.constant 8 : index
    %c0_5 = arith.constant 0 : index
    %4 = vector.load %arg14[%c8, %c0_5] : memref<48x128xf32, #tpu.memory_space<vmem>>, vector<8x128xf32>
    %c0_6 = arith.constant 0 : index
    %c0_7 = arith.constant 0 : index
    %5 = vector.load %arg2[%c0_6, %c0_7] : memref<8x8xf32, #tpu.memory_space<vmem>>, vector<8x8xf32>
    %c0_8 = arith.constant 0 : index
    %c0_9 = arith.constant 0 : index
    %6 = vector.load %arg14[%c0_8, %c0_9] : memref<48x128xf32, #tpu.memory_space<vmem>>, vector<8x128xf32>
    %cst_10 = arith.constant dense<0.000000e+00> : vector<8x128xf32>
    %7 = tpu.matmul %5, %6, %cst_10 {dimension_numbers = #tpu.dot_dimension_numbers<[1], [0], [0], [1], [0, 0, 1, 1], [], []>} : vector<8x8xf32>, vector<8x128xf32>, vector<8x128xf32> -> vector<8x128xf32>
    %8 = arith.addf %4, %7 : vector<8x128xf32>
    %c8_11 = arith.constant 8 : index
    %c0_12 = arith.constant 0 : index
    %9 = vector.load %arg14[%c8_11, %c0_12] : memref<48x128xf32, #tpu.memory_space<vmem>>, vector<8x128xf32>
    tpu.vector_store %arg14[%c8_11, %c0_12], %8 {strides = array<i32>} : memref<48x128xf32, #tpu.memory_space<vmem>>, vector<8x128xf32>,
    %c32 = arith.constant 32 : index
    %c0_13 = arith.constant 0 : index
    %10 = vector.load %arg14[%c32, %c0_13] : memref<48x128xf32, #tpu.memory_space<vmem>>, vector<8x128xf32>
    %c0_14 = arith.constant 0 : index
    %c0_15 = arith.constant 0 : index
    %11 = vector.load %arg3[%c0_14, %c0_15] : memref<8x8xf32, #tpu.memory_space<vmem>>, vector<8x8xf32>
    %c16 = arith.constant 16 : index
    %c0_16 = arith.constant 0 : index
    %12 = vector.load %arg14[%c16, %c0_16] : memref<48x128xf32, #tpu.memory_space<vmem>>, vector<8x128xf32>
    %cst_17 = arith.constant dense<0.000000e+00> : vector<8x128xf32>
    %13 = tpu.matmul %11, %12, %cst_17 {dimension_numbers = #tpu.dot_dimension_numbers<[1], [0], [0], [1], [0, 0, 1, 1], [], []>} : vector<8x8xf32>, vector<8x128xf32>, vector<8x128xf32> -> vector<8x128xf32>
    %14 = arith.addf %10, %13 : vector<8x128xf32>
    %c32_18 = arith.constant 32 : index
    %c0_19 = arith.constant 0 : index
    %15 = vector.load %arg14[%c32_18, %c0_19] : memref<48x128xf32, #tpu.memory_space<vmem>>, vector<8x128xf32>
    tpu.vector_store %arg14[%c32_18, %c0_19], %14 {strides = array<i32>} : memref<48x128xf32, #tpu.memory_space<vmem>>, vector<8x128xf32>,
    %c32_20 = arith.constant 32 : index
    %c0_21 = arith.constant 0 : index
    %16 = vector.load %arg14[%c32_20, %c0_21] : memref<48x128xf32, #tpu.memory_space<vmem>>, vector<8x128xf32>
    %c0_22 = arith.constant 0 : index
    %c0_23 = arith.constant 0 : index
    %17 = vector.load %arg4[%c0_22, %c0_23] : memref<8x8xf32, #tpu.memory_space<vmem>>, vector<8x8xf32>
    %c24 = arith.constant 24 : index
    %c0_24 = arith.constant 0 : index
    %18 = vector.load %arg14[%c24, %c0_24] : memref<48x128xf32, #tpu.memory_space<vmem>>, vector<8x128xf32>
    %cst_25 = arith.constant dense<0.000000e+00> : vector<8x128xf32>
    %19 = tpu.matmul %17, %18, %cst_25 {dimension_numbers = #tpu.dot_dimension_numbers<[1], [0], [0], [1], [0, 0, 1, 1], [], []>} : vector<8x8xf32>, vector<8x128xf32>, vector<8x128xf32> -> vector<8x128xf32>
    %20 = arith.addf %16, %19 : vector<8x128xf32>
    %c32_26 = arith.constant 32 : index
    %c0_27 = arith.constant 0 : index
    %21 = vector.load %arg14[%c32_26, %c0_27] : memref<48x128xf32, #tpu.memory_space<vmem>>, vector<8x128xf32>
    tpu.vector_store %arg14[%c32_26, %c0_27], %20 {strides = array<i32>} : memref<48x128xf32, #tpu.memory_space<vmem>>, vector<8x128xf32>,
    %c40 = arith.constant 40 : index
    %c0_28 = arith.constant 0 : index
    %22 = vector.load %arg14[%c40, %c0_28] : memref<48x128xf32, #tpu.memory_space<vmem>>, vector<8x128xf32>
    %c0_29 = arith.constant 0 : index
    %c0_30 = arith.constant 0 : index
    %23 = vector.load %arg5[%c0_29, %c0_30] : memref<8x8xf32, #tpu.memory_space<vmem>>, vector<8x8xf32>
    %c8_31 = arith.constant 8 : index
    %c0_32 = arith.constant 0 : index
    %24 = vector.load %arg14[%c8_31, %c0_32] : memref<48x128xf32, #tpu.memory_space<vmem>>, vector<8x128xf32>
    %cst_33 = arith.constant dense<0.000000e+00> : vector<8x128xf32>
    %25 = tpu.matmul %23, %24, %cst_33 {dimension_numbers = #tpu.dot_dimension_numbers<[1], [0], [0], [1], [0, 0, 1, 1], [], []>} : vector<8x8xf32>, vector<8x128xf32>, vector<8x128xf32> -> vector<8x128xf32>
    %26 = arith.addf %22, %25 : vector<8x128xf32>
    %c40_34 = arith.constant 40 : index
    %c0_35 = arith.constant 0 : index
    %27 = vector.load %arg14[%c40_34, %c0_35] : memref<48x128xf32, #tpu.memory_space<vmem>>, vector<8x128xf32>
    tpu.vector_store %arg14[%c40_34, %c0_35], %26 {strides = array<i32>} : memref<48x128xf32, #tpu.memory_space<vmem>>, vector<8x128xf32>,
    %c40_36 = arith.constant 40 : index
    %c0_37 = arith.constant 0 : index
    %28 = vector.load %arg14[%c40_36, %c0_37] : memref<48x128xf32, #tpu.memory_space<vmem>>, vector<8x128xf32>
    %c0_38 = arith.constant 0 : index
    %c0_39 = arith.constant 0 : index
    %29 = vector.load %arg6[%c0_38, %c0_39] : memref<8x8xf32, #tpu.memory_space<vmem>>, vector<8x8xf32>
    %c32_40 = arith.constant 32 : index
    %c0_41 = arith.constant 0 : index
    %30 = vector.load %arg14[%c32_40, %c0_41] : memref<48x128xf32, #tpu.memory_space<vmem>>, vector<8x128xf32>
    %cst_42 = arith.constant dense<0.000000e+00> : vector<8x128xf32>
    %31 = tpu.matmul %29, %30, %cst_42 {dimension_numbers = #tpu.dot_dimension_numbers<[1], [0], [0], [1], [0, 0, 1, 1], [], []>} : vector<8x8xf32>, vector<8x128xf32>, vector<8x128xf32> -> vector<8x128xf32>
    %32 = arith.addf %28, %31 : vector<8x128xf32>
    %c40_43 = arith.constant 40 : index
    %c0_44 = arith.constant 0 : index
    %33 = vector.load %arg14[%c40_43, %c0_44] : memref<48x128xf32, #tpu.memory_space<vmem>>, vector<8x128xf32>
    tpu.vector_store %arg14[%c40_43, %c0_44], %32 {strides = array<i32>} : memref<48x128xf32, #tpu.memory_space<vmem>>, vector<8x128xf32>,
    %c0_45 = arith.constant 0 : index
    %c0_46 = arith.constant 0 : index
    %34 = vector.load %arg7[%c0_45, %c0_46] : memref<8x8xf32, #tpu.memory_space<vmem>>, vector<8x8xf32>
    %c0_47 = arith.constant 0 : index
    %c0_48 = arith.constant 0 : index
    %35 = vector.load %arg14[%c0_47, %c0_48] : memref<48x128xf32, #tpu.memory_space<vmem>>, vector<8x128xf32>
    %cst_49 = arith.constant dense<0.000000e+00> : vector<8x128xf32>
    %36 = tpu.matmul %34, %35, %cst_49 {dimension_numbers = #tpu.dot_dimension_numbers<[1], [0], [0], [1], [0, 0, 1, 1], [], []>} : vector<8x8xf32>, vector<8x128xf32>, vector<8x128xf32> -> vector<8x128xf32>
    %c0_50 = arith.constant 0 : index
    %c0_51 = arith.constant 0 : index
    %37 = vector.load %arg8[%c0_50, %c0_51] : memref<8x8xf32, #tpu.memory_space<vmem>>, vector<8x8xf32>
    %c8_52 = arith.constant 8 : index
    %c0_53 = arith.constant 0 : index
    %38 = vector.load %arg14[%c8_52, %c0_53] : memref<48x128xf32, #tpu.memory_space<vmem>>, vector<8x128xf32>
    %cst_54 = arith.constant dense<0.000000e+00> : vector<8x128xf32>
    %39 = tpu.matmul %37, %38, %cst_54 {dimension_numbers = #tpu.dot_dimension_numbers<[1], [0], [0], [1], [0, 0, 1, 1], [], []>} : vector<8x8xf32>, vector<8x128xf32>, vector<8x128xf32> -> vector<8x128xf32>
    %40 = arith.maximumf %36, %39 : vector<8x128xf32>
    %c0_55 = arith.constant 0 : index
    %c0_56 = arith.constant 0 : index
    %41 = vector.load %arg9[%c0_55, %c0_56] : memref<8x8xf32, #tpu.memory_space<vmem>>, vector<8x8xf32>
    %c16_57 = arith.constant 16 : index
    %c0_58 = arith.constant 0 : index
    %42 = vector.load %arg14[%c16_57, %c0_58] : memref<48x128xf32, #tpu.memory_space<vmem>>, vector<8x128xf32>
    %cst_59 = arith.constant dense<0.000000e+00> : vector<8x128xf32>
    %43 = tpu.matmul %41, %42, %cst_59 {dimension_numbers = #tpu.dot_dimension_numbers<[1], [0], [0], [1], [0, 0, 1, 1], [], []>} : vector<8x8xf32>, vector<8x128xf32>, vector<8x128xf32> -> vector<8x128xf32>
    %44 = arith.maximumf %40, %43 : vector<8x128xf32>
    %c0_60 = arith.constant 0 : index
    %c0_61 = arith.constant 0 : index
    %45 = vector.load %arg10[%c0_60, %c0_61] : memref<8x8xf32, #tpu.memory_space<vmem>>, vector<8x8xf32>
    %c24_62 = arith.constant 24 : index
    %c0_63 = arith.constant 0 : index
    %46 = vector.load %arg14[%c24_62, %c0_63] : memref<48x128xf32, #tpu.memory_space<vmem>>, vector<8x128xf32>
    %cst_64 = arith.constant dense<0.000000e+00> : vector<8x128xf32>
    %47 = tpu.matmul %45, %46, %cst_64 {dimension_numbers = #tpu.dot_dimension_numbers<[1], [0], [0], [1], [0, 0, 1, 1], [], []>} : vector<8x8xf32>, vector<8x128xf32>, vector<8x128xf32> -> vector<8x128xf32>
    %48 = arith.maximumf %44, %47 : vector<8x128xf32>
    %c0_65 = arith.constant 0 : index
    %c0_66 = arith.constant 0 : index
    %49 = vector.load %arg11[%c0_65, %c0_66] : memref<8x8xf32, #tpu.memory_space<vmem>>, vector<8x8xf32>
    %c32_67 = arith.constant 32 : index
    %c0_68 = arith.constant 0 : index
    %50 = vector.load %arg14[%c32_67, %c0_68] : memref<48x128xf32, #tpu.memory_space<vmem>>, vector<8x128xf32>
    %cst_69 = arith.constant dense<0.000000e+00> : vector<8x128xf32>
    %51 = tpu.matmul %49, %50, %cst_69 {dimension_numbers = #tpu.dot_dimension_numbers<[1], [0], [0], [1], [0, 0, 1, 1], [], []>} : vector<8x8xf32>, vector<8x128xf32>, vector<8x128xf32> -> vector<8x128xf32>
    %52 = arith.maximumf %48, %51 : vector<8x128xf32>
    %c0_70 = arith.constant 0 : index
    %c0_71 = arith.constant 0 : index
    %53 = vector.load %arg12[%c0_70, %c0_71] : memref<8x8xf32, #tpu.memory_space<vmem>>, vector<8x8xf32>
    %c40_72 = arith.constant 40 : index
    %c0_73 = arith.constant 0 : index
    %54 = vector.load %arg14[%c40_72, %c0_73] : memref<48x128xf32, #tpu.memory_space<vmem>>, vector<8x128xf32>
    %cst_74 = arith.constant dense<0.000000e+00> : vector<8x128xf32>
    %55 = tpu.matmul %53, %54, %cst_74 {dimension_numbers = #tpu.dot_dimension_numbers<[1], [0], [0], [1], [0, 0, 1, 1], [], []>} : vector<8x8xf32>, vector<8x128xf32>, vector<8x128xf32> -> vector<8x128xf32>
    %56 = arith.maximumf %52, %55 : vector<8x128xf32>
    %c0_75 = arith.constant 0 : index
    %c0_76 = arith.constant 0 : index
    %57 = vector.load %arg13[%c0_75, %c0_76] : memref<8x128xf32, #tpu.memory_space<vmem>>, vector<8x128xf32>
    tpu.vector_store %arg13[%c0_75, %c0_76], %56 {strides = array<i32>} : memref<8x128xf32, #tpu.memory_space<vmem>>, vector<8x128xf32>,
    return
  }
}

</mosaic_0001>

<llo_original>
// kernel: tpu_custom_call.1
$region0: #{tpu_custom_call.1}
  #allocation0 [shape = 'u32[]', space=smem, size = 0x4, offset = 0x4, fixed_abs, tag = 'smem constant byte address 0x4 - core index']
  #allocation1 [shape = 'u32[144,128]{1,0:T(1,128)}', space=vmem, size = 0x12000, scoped, tag = 'internal scratch']
  #allocation2 [shape = 'f32[48,128]{1,0:T(8,128)}', space=vmem, size = 0x6000, scoped, tag = 'scratch operand']
  %s0 = inlined_call_operand.hbm [shape: f32[128,128], index: 0, kind: input, shape index: {}]
  %s1 = inlined_call_operand.hbm [shape: f32[48,128], index: 1, kind: input, shape index: {}]
  %s2 = inlined_call_operand.hbm [shape: f32[8,8], index: 2, kind: input, shape index: {}]
  %s3 = inlined_call_operand.hbm [shape: f32[8,8], index: 3, kind: input, shape index: {}]
  %s4 = inlined_call_operand.hbm [shape: f32[8,8], index: 4, kind: input, shape index: {}]
  %s5 = inlined_call_operand.vmem [shape: f32[8,8], index: 5, kind: input, shape index: {}]
  %s6 = inlined_call_operand.hbm [shape: f32[8,8], index: 6, kind: input, shape index: {}]
  %s7 = inlined_call_operand.hbm [shape: f32[8,8], index: 7, kind: input, shape index: {}]
  %s8 = inlined_call_operand.hbm [shape: f32[8,8], index: 8, kind: input, shape index: {}]
  %s9 = inlined_call_operand.vmem [shape: f32[8,8], index: 9, kind: input, shape index: {}]
  %s10 = inlined_call_operand.hbm [shape: f32[8,8], index: 10, kind: input, shape index: {}]
  %s11 = inlined_call_operand.hbm [shape: f32[8,8], index: 11, kind: input, shape index: {}]
  %s12 = inlined_call_operand.hbm [shape: f32[8,8], index: 12, kind: input, shape index: {}]
  %s13 = inlined_call_operand.hbm [shape: f32[8,128], index: 13, kind: output, shape index: {}]
  %s14 = sld [smem:[#allocation0]]
  $region106: #{tpu_custom_call.1} parent=0
    _
  %s16 = ssub.s32 1, %s14
  %s17 = scalar_select 0, %s16, %s14
  $region1: #{tpu_custom_call.1} parent=0
    #allocation3 [shape = 'u8[65536]{0}', space=vmem, size = 0x10000, scoped, tag = 'input window, operand 0, single buffered']
    #allocation4 [shape = 's32[1]{0}', space=sflag, size = 0x4, scoped, tag = 'scoped memory for tpu_custom_call.1']
    #allocation5 [shape = 's32[1]{0}', space=sflag, size = 0x4, scoped, tag = 'scoped memory for tpu_custom_call.1']
    #allocation6 [shape = 'u8[24576]{0}', space=vmem, size = 0x6000, scoped, tag = 'input window, operand 1, single buffered']
    #allocation7 [shape = 's32[1]{0}', space=sflag, size = 0x4, scoped, tag = 'scoped memory for tpu_custom_call.1']
    #allocation8 [shape = 'u8[4096]{0}', space=vmem, size = 0x1000, scoped, tag = 'input window, operand 2, single buffered']
    #allocation9 [shape = 'u8[4096]{0}', space=vmem, size = 0x1000, scoped, tag = 'input window, operand 3, single buffered']
    #allocation10 [shape = 's32[1]{0}', space=sflag, size = 0x4, scoped, tag = 'scoped memory for tpu_custom_call.1']
    #allocation11 [shape = 'u8[4096]{0}', space=vmem, size = 0x1000, scoped, tag = 'input window, operand 4, single buffered']
    #allocation12 [shape = 'u8[4096]{0}', space=vmem, size = 0x1000, scoped, tag = 'input window, operand 6, single buffered']
    #allocation13 [shape = 's32[1]{0}', space=sflag, size = 0x4, scoped, tag = 'scoped memory for tpu_custom_call.1']
    #allocation14 [shape = 'u8[4096]{0}', space=vmem, size = 0x1000, scoped, tag = 'input window, operand 7, single buffered']
    #allocation15 [shape = 'u8[4096]{0}', space=vmem, size = 0x1000, scoped, tag = 'input window, operand 8, single buffered']
    #allocation16 [shape = 's32[1]{0}', space=sflag, size = 0x4, scoped, tag = 'scoped memory for tpu_custom_call.1']
    #allocation17 [shape = 'u8[4096]{0}', space=vmem, size = 0x1000, scoped, tag = 'input window, operand 10, single buffered']
    #allocation18 [shape = 'u8[4096]{0}', space=vmem, size = 0x1000, scoped, tag = 'input window, operand 11, single buffered']
    #allocation19 [shape = 's32[1]{0}', space=sflag, size = 0x4, scoped, tag = 'scoped memory for tpu_custom_call.1']
    #allocation20 [shape = 'u8[4096]{0}', space=vmem, size = 0x1000, scoped, tag = 'input window, operand 12, single buffered']
    #allocation21 [shape = 'u8[4096]{0}', space=vmem, size = 0x1000, scoped, tag = 'output window, operand 0, single buffered']
    %18 = vsyncpa [#allocation4], 0
    %19 = vsyncpa [#allocation7], 0
    %20 = vsyncpa [#allocation10], 0
    %21 = vsyncpa [#allocation13], 0
    %22 = vsyncpa [#allocation16], 0
    %23 = vsyncpa [#allocation19], 0
    %24 = vsyncpa [#allocation5], 0
    // Predicated region
    $region2: #{tpu_custom_call.1} parent=1 // pred_check
      _
    $region3: #{tpu_custom_call.1} parent=1 // pred_check_branch
      %26 = sbr.rel (0) target = $region5
    $region4: #{tpu_custom_call.1} parent=1 // pred_region
      %s28 = ssub.s32 2048, 2048
      %29 = vsyncadd [#allocation4], %s28
      %s30 = sshll.u32 [#allocation3], 4
      %s31 = int_to_ptr.vmem [resolvable:$true] %s30
      %36 = dma.hbm_to_vmem [thread:$0]  %s0, 2048, %s31, [#allocation4], 128, 128, 8
    $region5: #{tpu_custom_call.1} parent=1 // pred_fallthru
      _
    // Predicated region
    $region6: #{tpu_custom_call.1} parent=1 // pred_check
      _
    $region7: #{tpu_custom_call.1} parent=1 // pred_check_branch
      %38 = sbr.rel (0) target = $region9
    $region8: #{tpu_custom_call.1} parent=1 // pred_region
      %s40 = ssub.s32 768, 768
      %41 = vsyncadd [#allocation7], %s40
      %s42 = sshll.u32 [#allocation6], 4
      %s43 = int_to_ptr.vmem [resolvable:$true] %s42
      %48 = dma.hbm_to_vmem [thread:$0]  %s1, 768, %s43, [#allocation7], 128, 128, 8
    $region9: #{tpu_custom_call.1} parent=1 // pred_fallthru
      _
    // Predicated region
    $region10: #{tpu_custom_call.1} parent=1 // pred_check
      _
    $region11: #{tpu_custom_call.1} parent=1 // pred_check_branch
      %50 = sbr.rel (0) target = $region13
    $region12: #{tpu_custom_call.1} parent=1 // pred_region
      %s52 = ssub.s32 128, 128
      %53 = vsyncadd [#allocation7], %s52
      %s55 = sshll.u32 [#allocation8], 4
      %s56 = int_to_ptr.vmem [resolvable:$true] %s55
      %58 = dma.hbm_to_vmem [thread:$0]  %s2, 128, %s56, [#allocation7]
    $region13: #{tpu_custom_call.1} parent=1 // pred_fallthru
      _
    // Predicated region
    $region14: #{tpu_custom_call.1} parent=1 // pred_check
      _
    $region15: #{tpu_custom_call.1} parent=1 // pred_check_branch
      %60 = sbr.rel (0) target = $region17
    $region16: #{tpu_custom_call.1} parent=1 // pred_region
      %s62 = ssub.s32 128, 128
      %63 = vsyncadd [#allocation10], %s62
      %s65 = sshll.u32 [#allocation9], 4
      %s66 = int_to_ptr.vmem [resolvable:$true] %s65
      %68 = dma.hbm_to_vmem [thread:$0]  %s3, 128, %s66, [#allocation10]
    $region17: #{tpu_custom_call.1} parent=1 // pred_fallthru
      _
    // Predicated region
    $region18: #{tpu_custom_call.1} parent=1 // pred_check
      _
    $region19: #{tpu_custom_call.1} parent=1 // pred_check_branch
      %70 = sbr.rel (0) target = $region21
    $region20: #{tpu_custom_call.1} parent=1 // pred_region
      %s72 = ssub.s32 128, 128
      %73 = vsyncadd [#allocation10], %s72
      %s75 = sshll.u32 [#allocation11], 4
      %s76 = int_to_ptr.vmem [resolvable:$true] %s75
      %78 = dma.hbm_to_vmem [thread:$0]  %s4, 128, %s76, [#allocation10]
    $region21: #{tpu_custom_call.1} parent=1 // pred_fallthru
      _
    // Predicated region
    $region22: #{tpu_custom_call.1} parent=1 // pred_check
      _
    $region23: #{tpu_custom_call.1} parent=1 // pred_check_branch
      %80 = sbr.rel (0) target = $region25
    $region24: #{tpu_custom_call.1} parent=1 // pred_region
      _
    $region25: #{tpu_custom_call.1} parent=1 // pred_fallthru
      _
    // Predicated region
    $region26: #{tpu_custom_call.1} parent=1 // pred_check
      _
    $region27: #{tpu_custom_call.1} parent=1 // pred_check_branch
      %82 = sbr.rel (0) target = $region29
    $region28: #{tpu_custom_call.1} parent=1 // pred_region
      %s84 = ssub.s32 128, 128
      %85 = vsyncadd [#allocation13], %s84
      %s87 = sshll.u32 [#allocation12], 4
      %s88 = int_to_ptr.vmem [resolvable:$true] %s87
      %90 = dma.hbm_to_vmem [thread:$0]  %s6, 128, %s88, [#allocation13]
    $region29: #{tpu_custom_call.1} parent=1 // pred_fallthru
      _
    // Predicated region
    $region30: #{tpu_custom_call.1} parent=1 // pred_check
      _
    $region31: #{tpu_custom_call.1} parent=1 // pred_check_branch
      %92 = sbr.rel (0) target = $region33
    $region32: #{tpu_custom_call.1} parent=1 // pred_region
      %s94 = ssub.s32 128, 128
      %95 = vsyncadd [#allocation13], %s94
      %s97 = sshll.u32 [#allocation14], 4
      %s98 = int_to_ptr.vmem [resolvable:$true] %s97
      %100 = dma.hbm_to_vmem [thread:$0]  %s7, 128, %s98, [#allocation13]
    $region33: #{tpu_custom_call.1} parent=1 // pred_fallthru
      _
    // Predicated region
    $region34: #{tpu_custom_call.1} parent=1 // pred_check
      _
    $region35: #{tpu_custom_call.1} parent=1 // pred_check_branch
      %102 = sbr.rel (0) target = $region37
    $region36: #{tpu_custom_call.1} parent=1 // pred_region
      %s104 = ssub.s32 128, 128
      %105 = vsyncadd [#allocation16], %s104
      %s107 = sshll.u32 [#allocation15], 4
      %s108 = int_to_ptr.vmem [resolvable:$true] %s107
      %110 = dma.hbm_to_vmem [thread:$0]  %s8, 128, %s108, [#allocation16]
    $region37: #{tpu_custom_call.1} parent=1 // pred_fallthru
      _
    // Predicated region
    $region38: #{tpu_custom_call.1} parent=1 // pred_check
      _
    $region39: #{tpu_custom_call.1} parent=1 // pred_check_branch
      %112 = sbr.rel (0) target = $region41
    $region40: #{tpu_custom_call.1} parent=1 // pred_region
      _
    $region41: #{tpu_custom_call.1} parent=1 // pred_fallthru
      _
    // Predicated region
    $region42: #{tpu_custom_call.1} parent=1 // pred_check
      _
    $region43: #{tpu_custom_call.1} parent=1 // pred_check_branch
      %114 = sbr.rel (0) target = $region45
    $region44: #{tpu_custom_call.1} parent=1 // pred_region
      %s116 = ssub.s32 128, 128
      %117 = vsyncadd [#allocation16], %s116
      %s119 = sshll.u32 [#allocation17], 4
      %s120 = int_to_ptr.vmem [resolvable:$true] %s119
      %122 = dma.hbm_to_vmem [thread:$0]  %s10, 128, %s120, [#allocation16]
    $region45: #{tpu_custom_call.1} parent=1 // pred_fallthru
      _
    // Predicated region
    $region46: #{tpu_custom_call.1} parent=1 // pred_check
      _
    $region47: #{tpu_custom_call.1} parent=1 // pred_check_branch
      %124 = sbr.rel (0) target = $region49
    $region48: #{tpu_custom_call.1} parent=1 // pred_region
      %s126 = ssub.s32 128, 128
      %127 = vsyncadd [#allocation19], %s126
      %s129 = sshll.u32 [#allocation18], 4
      %s130 = int_to_ptr.vmem [resolvable:$true] %s129
      %132 = dma.hbm_to_vmem [thread:$0]  %s11, 128, %s130, [#allocation19]
    $region49: #{tpu_custom_call.1} parent=1 // pred_fallthru
      _
    // Predicated region
    $region50: #{tpu_custom_call.1} parent=1 // pred_check
      _
    $region51: #{tpu_custom_call.1} parent=1 // pred_check_branch
      %134 = sbr.rel (0) target = $region53
    $region52: #{tpu_custom_call.1} parent=1 // pred_region
      %s136 = ssub.s32 128, 128
      %137 = vsyncadd [#allocation19], %s136
      %s139 = sshll.u32 [#allocation20], 4
      %s140 = int_to_ptr.vmem [resolvable:$true] %s139
      %142 = dma.hbm_to_vmem [thread:$0]  %s12, 128, %s140, [#allocation19]
    $region53: #{tpu_custom_call.1} parent=1 // pred_fallthru
      _
    // Predicated region
    $region54: #{tpu_custom_call.1} parent=1 // pred_check
      _
    $region55: #{tpu_custom_call.1} parent=1 // pred_check_branch
      %144 = sbr.rel (0) target = $region57
    $region56: #{tpu_custom_call.1} parent=1 // pred_region
      %145 = dma.done [#allocation4], 2048
    $region57: #{tpu_custom_call.1} parent=1 // pred_fallthru
      _
    // Predicated region
    $region58: #{tpu_custom_call.1} parent=1 // pred_check
      _
    $region59: #{tpu_custom_call.1} parent=1 // pred_check_branch
      %147 = sbr.rel (0) target = $region61
    $region60: #{tpu_custom_call.1} parent=1 // pred_region
      %148 = dma.done [#allocation7], 768
    $region61: #{tpu_custom_call.1} parent=1 // pred_fallthru
      _
    // Predicated region
    $region62: #{tpu_custom_call.1} parent=1 // pred_check
      _
    $region63: #{tpu_custom_call.1} parent=1 // pred_check_branch
      %150 = sbr.rel (0) target = $region65
    $region64: #{tpu_custom_call.1} parent=1 // pred_region
      %151 = dma.done [#allocation7], 128
    $region65: #{tpu_custom_call.1} parent=1 // pred_fallthru
      _
    // Predicated region
    $region66: #{tpu_custom_call.1} parent=1 // pred_check
      _
    $region67: #{tpu_custom_call.1} parent=1 // pred_check_branch
      %153 = sbr.rel (0) target = $region69
    $region68: #{tpu_custom_call.1} parent=1 // pred_region
      %154 = dma.done [#allocation10], 128
    $region69: #{tpu_custom_call.1} parent=1 // pred_fallthru
      _
    // Predicated region
    $region70: #{tpu_custom_call.1} parent=1 // pred_check
      _
    $region71: #{tpu_custom_call.1} parent=1 // pred_check_branch
      %156 = sbr.rel (0) target = $region73
    $region72: #{tpu_custom_call.1} parent=1 // pred_region
      %157 = dma.done [#allocation10], 128
    $region73: #{tpu_custom_call.1} parent=1 // pred_fallthru
      _
    // Predicated region
    $region74: #{tpu_custom_call.1} parent=1 // pred_check
      _
    $region75: #{tpu_custom_call.1} parent=1 // pred_check_branch
      %159 = sbr.rel (0) target = $region77
    $region76: #{tpu_custom_call.1} parent=1 // pred_region
      %160 = dma.done [#allocation13], 128
    $region77: #{tpu_custom_call.1} parent=1 // pred_fallthru
      _
    // Predicated region
    $region78: #{tpu_custom_call.1} parent=1 // pred_check
      _
    $region79: #{tpu_custom_call.1} parent=1 // pred_check_branch
      %162 = sbr.rel (0) target = $region81
    $region80: #{tpu_custom_call.1} parent=1 // pred_region
      %163 = dma.done [#allocation13], 128
    $region81: #{tpu_custom_call.1} parent=1 // pred_fallthru
      _
    // Predicated region
    $region82: #{tpu_custom_call.1} parent=1 // pred_check
      _
    $region83: #{tpu_custom_call.1} parent=1 // pred_check_branch
      %165 = sbr.rel (0) target = $region85
    $region84: #{tpu_custom_call.1} parent=1 // pred_region
      %166 = dma.done [#allocation16], 128
    $region85: #{tpu_custom_call.1} parent=1 // pred_fallthru
      _
    // Predicated region
    $region86: #{tpu_custom_call.1} parent=1 // pred_check
      _
    $region87: #{tpu_custom_call.1} parent=1 // pred_check_branch
      %168 = sbr.rel (0) target = $region89
    $region88: #{tpu_custom_call.1} parent=1 // pred_region
      %169 = dma.done [#allocation16], 128
    $region89: #{tpu_custom_call.1} parent=1 // pred_fallthru
      _
    // Predicated region
    $region90: #{tpu_custom_call.1} parent=1 // pred_check
      _
    $region91: #{tpu_custom_call.1} parent=1 // pred_check_branch
      %171 = sbr.rel (0) target = $region93
    $region92: #{tpu_custom_call.1} parent=1 // pred_region
      %172 = dma.done [#allocation19], 128
    $region93: #{tpu_custom_call.1} parent=1 // pred_fallthru
      _
    // Predicated region
    $region94: #{tpu_custom_call.1} parent=1 // pred_check
      _
    $region95: #{tpu_custom_call.1} parent=1 // pred_check_branch
      %174 = sbr.rel (0) target = $region97
    $region96: #{tpu_custom_call.1} parent=1 // pred_region
      %175 = dma.done [#allocation19], 128
    $region97: #{tpu_custom_call.1} parent=1 // pred_fallthru
      _
    %v176 = vld [vmem:[#allocation6] sm:$0xff]
    %v177 = vld [vmem:[#allocation6 + $0x8] sm:$0xff]
    %v178 = vld [vmem:[#allocation6 + $0x10] sm:$0xff]
    %v179 = vld [vmem:[#allocation6 + $0x18] sm:$0xff]
    %v180 = vld [vmem:[#allocation6 + $0x20] sm:$0xff]
    %v181 = vld [vmem:[#allocation6 + $0x28] sm:$0xff]
    %v182 = vld [vmem:[#allocation3] sm:$0xff]
    %v183 = vld [vmem:[#allocation3 + $0x8] sm:$0xff]
    %v184 = vld [vmem:[#allocation3 + $0x10] sm:$0xff]
    %v185 = vld [vmem:[#allocation3 + $0x18] sm:$0xff]
    %v186 = vld [vmem:[#allocation3 + $0x20] sm:$0xff]
    %v187 = vld [vmem:[#allocation3 + $0x28] sm:$0xff]
    %v188 = vld [vmem:[#allocation3 + $0x30] sm:$0xff]
    %v189 = vld [vmem:[#allocation3 + $0x38] sm:$0xff]
    %v190 = vld [vmem:[#allocation3 + $0x40] sm:$0xff]
    %v191 = vld [vmem:[#allocation3 + $0x48] sm:$0xff]
    %v192 = vld [vmem:[#allocation3 + $0x50] sm:$0xff]
    %v193 = vld [vmem:[#allocation3 + $0x58] sm:$0xff]
    %v194 = vld [vmem:[#allocation3 + $0x60] sm:$0xff]
    %v195 = vld [vmem:[#allocation3 + $0x68] sm:$0xff]
    %v196 = vld [vmem:[#allocation3 + $0x70] sm:$0xff]
    %v197 = vld [vmem:[#allocation3 + $0x78] sm:$0xff]
    %198 = vmatprep.subr.mxu0 0.0
    %199 = vmatpush1.msra.mxu0 %v197
    %200 = vmatprep.subr.mxu0 0.0
    %201 = vmatpush1.msra.mxu0 %v196
    %202 = vmatprep.subr.mxu0 0.0
    %203 = vmatpush1.msra.mxu0 %v195
    %204 = vmatprep.subr.mxu0 0.0
    %205 = vmatpush1.msra.mxu0 %v194
    %206 = vmatprep.subr.mxu0 0.0
    %207 = vmatpush1.msra.mxu0 %v193
    %208 = vmatprep.subr.mxu0 0.0
    %209 = vmatpush1.msra.mxu0 %v192
    %210 = vmatprep.subr.mxu0 0.0
    %211 = vmatpush1.msra.mxu0 %v191
    %212 = vmatprep.subr.mxu0 0.0
    %213 = vmatpush1.msra.mxu0 %v190
    %214 = vmatprep.subr.mxu0 0.0
    %215 = vmatpush1.msra.mxu0 %v189
    %216 = vmatprep.subr.mxu0 0.0
    %217 = vmatpush1.msra.mxu0 %v188
    %218 = vmatprep.subr.mxu0 0.0
    %219 = vmatpush1.msra.mxu0 %v187
    %220 = vmatprep.subr.mxu0 0.0
    %221 = vmatpush1.msra.mxu0 %v186
    %222 = vmatprep.subr.mxu0 0.0
    %223 = vmatpush1.msra.mxu0 %v185
    %224 = vmatprep.subr.mxu0 0.0
    %225 = vmatpush1.msra.mxu0 %v184
    %226 = vmatprep.subr.mxu0 0.0
    %227 = vmatpush1.msra.mxu0 %v183
    %228 = vmatprep.subr.mxu0 0.0
    %229 = vmatpush1.msra.mxu0 %v182
    %230 = vmatprep.subr.mxu0 0.0
    %231 = vmatpush2.msra.mxu0 0.0
    %232 = vmatprep.subr.mxu0 0.0
    %233 = vmatpush2.msra.mxu0 0.0
    %234 = vmatprep.subr.mxu0 0.0
    %235 = vmatpush2.msra.mxu0 0.0
    %236 = vmatprep.subr.mxu0 0.0
    %237 = vmatpush2.msra.mxu0 0.0
    %238 = vmatprep.subr.mxu0 0.0
    %239 = vmatpush2.msra.mxu0 0.0
    %240 = vmatprep.subr.mxu0 0.0
    %241 = vmatpush2.msra.mxu0 0.0
    %242 = vmatprep.subr.mxu0 0.0
    %243 = vmatpush2.msra.mxu0 0.0
    %244 = vmatprep.subr.mxu0 0.0
    %245 = vmatpush2.msra.mxu0 0.0
    %246 = vmatprep.subr.mxu0 0.0
    %247 = vmatpush2.msra.mxu0 0.0
    %248 = vmatprep.subr.mxu0 0.0
    %249 = vmatpush2.msra.mxu0 0.0
    %250 = vmatprep.subr.mxu0 0.0
    %251 = vmatpush2.msra.mxu0 0.0
    %252 = vmatprep.subr.mxu0 0.0
    %253 = vmatpush2.msra.mxu0 0.0
    %254 = vmatprep.subr.mxu0 0.0
    %255 = vmatpush2.msra.mxu0 0.0
    %256 = vmatprep.subr.mxu0 0.0
    %257 = vmatpush2.msra.mxu0 0.0
    %258 = vmatprep.subr.mxu0 0.0
    %259 = vmatpush2.msra.mxu0 0.0
    %260 = vmatprep.subr.mxu0 0.0
    %261 = vmatpush2.msra.mxu0 0.0
    %262 = vmatprep.mubr.f32.mxu0 0.0
    %263 = vmatmul.mubr.f32.gmra.mxu0 %v176
    %v264 = vpop.f32.mrf.mxu0
    %v265 = vadd.f32 0.0, %v264
    %v266 = vpop.f32.mrf.mxu0
    %267 = vmatprep.mubr.f32.mxu0 0.0
    %268 = vmatmul.mubr.f32.gmra.mxu0 %v177
    %v269 = vpop.f32.mrf.mxu0
    %v270 = vadd.f32 0.0, %v269
    %v271 = vpop.f32.mrf.mxu0
    %272 = vmatprep.mubr.f32.mxu0 0.0
    %273 = vmatmul.mubr.f32.gmra.mxu0 %v178
    %v274 = vpop.f32.mrf.mxu0
    %v275 = vadd.f32 0.0, %v274
    %v276 = vpop.f32.mrf.mxu0
    %277 = vmatprep.mubr.f32.mxu0 0.0
    %278 = vmatmul.mubr.f32.gmra.mxu0 %v179
    %v279 = vpop.f32.mrf.mxu0
    %v280 = vadd.f32 0.0, %v279
    %v281 = vpop.f32.mrf.mxu0
    %282 = vmatprep.mubr.f32.mxu0 0.0
    %283 = vmatmul.mubr.f32.gmra.mxu0 %v180
    %v284 = vpop.f32.mrf.mxu0
    %v285 = vadd.f32 0.0, %v284
    %v286 = vpop.f32.mrf.mxu0
    %287 = vmatprep.mubr.f32.mxu0 0.0
    %288 = vmatmul.mubr.f32.gmra.mxu0 %v181
    %v289 = vpop.f32.mrf.mxu0
    %v290 = vadd.f32 0.0, %v289
    %v291 = vpop.f32.mrf.mxu0
    %292 = vdwg.mxu0
    %293 = vst [vmem:[#allocation2] sm:$0xff] %v265
    %294 = vst [vmem:[#allocation2 + $0x8] sm:$0xff] %v270
    %295 = vst [vmem:[#allocation2 + $0x10] sm:$0xff] %v275
    %296 = vst [vmem:[#allocation2 + $0x18] sm:$0xff] %v280
    %297 = vst [vmem:[#allocation2 + $0x20] sm:$0xff] %v285
    %298 = vst [vmem:[#allocation2 + $0x28] sm:$0xff] %v290
    %v299 = vld [vmem:[#allocation2 + $0x8] sm:$0xff]
    %v300 = vld [vmem:[#allocation8] sm:$0xff]
    %v301 = vld [vmem:[#allocation2] sm:$0xff]
    %vm302 = vcmask 64512
    %v304 = vsel %vm302, %v300, 0
    %306 = vmatprep.subr.mxu0 0.0
    %307 = vmatpush1.msra.mxu0 0.0
    %308 = vmatprep.subr.mxu0 0.0
    %309 = vmatpush1.msra.mxu0 0.0
    %310 = vmatprep.subr.mxu0 0.0
    %311 = vmatpush1.msra.mxu0 0.0
    %312 = vmatprep.subr.mxu0 0.0
    %313 = vmatpush1.msra.mxu0 0.0
    %314 = vmatprep.subr.mxu0 0.0
    %315 = vmatpush1.msra.mxu0 0.0
    %316 = vmatprep.subr.mxu0 0.0
    %317 = vmatpush1.msra.mxu0 0.0
    %318 = vmatprep.subr.mxu0 0.0
    %319 = vmatpush1.msra.mxu0 0.0
    %320 = vmatprep.subr.mxu0 0.0
    %321 = vmatpush1.msra.mxu0 0.0
    %322 = vmatprep.subr.mxu0 0.0
    %323 = vmatpush1.msra.mxu0 0.0
    %324 = vmatprep.subr.mxu0 0.0
    %325 = vmatpush1.msra.mxu0 0.0
    %326 = vmatprep.subr.mxu0 0.0
    %327 = vmatpush1.msra.mxu0 0.0
    %328 = vmatprep.subr.mxu0 0.0
    %329 = vmatpush1.msra.mxu0 0.0
    %330 = vmatprep.subr.mxu0 0.0
    %331 = vmatpush1.msra.mxu0 0.0
    %332 = vmatprep.subr.mxu0 0.0
    %333 = vmatpush1.msra.mxu0 0.0
    %334 = vmatprep.subr.mxu0 0.0
    %335 = vmatpush1.msra.mxu0 0.0
    %336 = vmatprep.subr.mxu0 0.0
    %337 = vmatpush1.msra.mxu0 %v301
    %338 = vmatprep.subr.mxu0 0.0
    %339 = vmatpush2.msra.mxu0 0.0
    %340 = vmatprep.subr.mxu0 0.0
    %341 = vmatpush2.msra.mxu0 0.0
    %342 = vmatprep.subr.mxu0 0.0
    %343 = vmatpush2.msra.mxu0 0.0
    %344 = vmatprep.subr.mxu0 0.0
    %345 = vmatpush2.msra.mxu0 0.0
    %346 = vmatprep.subr.mxu0 0.0
    %347 = vmatpush2.msra.mxu0 0.0
    %348 = vmatprep.subr.mxu0 0.0
    %349 = vmatpush2.msra.mxu0 0.0
    %350 = vmatprep.subr.mxu0 0.0
    %351 = vmatpush2.msra.mxu0 0.0
    %352 = vmatprep.subr.mxu0 0.0
    %353 = vmatpush2.msra.mxu0 0.0
    %354 = vmatprep.subr.mxu0 0.0
    %355 = vmatpush2.msra.mxu0 0.0
    %356 = vmatprep.subr.mxu0 0.0
    %357 = vmatpush2.msra.mxu0 0.0
    %358 = vmatprep.subr.mxu0 0.0
    %359 = vmatpush2.msra.mxu0 0.0
    %360 = vmatprep.subr.mxu0 0.0
    %361 = vmatpush2.msra.mxu0 0.0
    %362 = vmatprep.subr.mxu0 0.0
    %363 = vmatpush2.msra.mxu0 0.0
    %364 = vmatprep.subr.mxu0 0.0
    %365 = vmatpush2.msra.mxu0 0.0
    %366 = vmatprep.subr.mxu0 0.0
    %367 = vmatpush2.msra.mxu0 0.0
    %368 = vmatprep.subr.mxu0 0.0
    %369 = vmatpush2.msra.mxu0 0.0
    %370 = vmatprep.mubr.f32.mxu0 0.0
    %371 = vmatmul.mubr.f32.gmra.mxu0 %v304
    %v372 = vpop.f32.mrf.mxu0
    %v373 = vadd.f32 0.0, %v372
    %v374 = vpop.f32.mrf.mxu0
    %375 = vdwg.mxu0
    %v376 = vadd.f32 %v299, %v373
    %377 = vst [vmem:[#allocation2 + $0x8] sm:$0xff] %v376
    %v378 = vld [vmem:[#allocation2 + $0x20] sm:$0xff]
    %v379 = vld [vmem:[#allocation9] sm:$0xff]
    %v380 = vld [vmem:[#allocation2 + $0x10] sm:$0xff]
    %v382 = vsel %vm302, %v379, 0
    %384 = vmatprep.subr.mxu0 0.0
    %385 = vmatpush1.msra.mxu0 0.0
    %386 = vmatprep.subr.mxu0 0.0
    %387 = vmatpush1.msra.mxu0 0.0
    %388 = vmatprep.subr.mxu0 0.0
    %389 = vmatpush1.msra.mxu0 0.0
    %390 = vmatprep.subr.mxu0 0.0
    %391 = vmatpush1.msra.mxu0 0.0
    %392 = vmatprep.subr.mxu0 0.0
    %393 = vmatpush1.msra.mxu0 0.0
    %394 = vmatprep.subr.mxu0 0.0
    %395 = vmatpush1.msra.mxu0 0.0
    %396 = vmatprep.subr.mxu0 0.0
    %397 = vmatpush1.msra.mxu0 0.0
    %398 = vmatprep.subr.mxu0 0.0
    %399 = vmatpush1.msra.mxu0 0.0
    %400 = vmatprep.subr.mxu0 0.0
    %401 = vmatpush1.msra.mxu0 0.0
    %402 = vmatprep.subr.mxu0 0.0
    %403 = vmatpush1.msra.mxu0 0.0
    %404 = vmatprep.subr.mxu0 0.0
    %405 = vmatpush1.msra.mxu0 0.0
    %406 = vmatprep.subr.mxu0 0.0
    %407 = vmatpush1.msra.mxu0 0.0
    %408 = vmatprep.subr.mxu0 0.0
    %409 = vmatpush1.msra.mxu0 0.0
    %410 = vmatprep.subr.mxu0 0.0
    %411 = vmatpush1.msra.mxu0 0.0
    %412 = vmatprep.subr.mxu0 0.0
    %413 = vmatpush1.msra.mxu0 0.0
    %414 = vmatprep.subr.mxu0 0.0
    %415 = vmatpush1.msra.mxu0 %v380
    %416 = vmatprep.subr.mxu0 0.0
    %417 = vmatpush2.msra.mxu0 0.0
    %418 = vmatprep.subr.mxu0 0.0
    %419 = vmatpush2.msra.mxu0 0.0
    %420 = vmatprep.subr.mxu0 0.0
    %421 = vmatpush2.msra.mxu0 0.0
    %422 = vmatprep.subr.mxu0 0.0
    %423 = vmatpush2.msra.mxu0 0.0
    %424 = vmatprep.subr.mxu0 0.0
    %425 = vmatpush2.msra.mxu0 0.0
    %426 = vmatprep.subr.mxu0 0.0
    %427 = vmatpush2.msra.mxu0 0.0
    %428 = vmatprep.subr.mxu0 0.0
    %429 = vmatpush2.msra.mxu0 0.0
    %430 = vmatprep.subr.mxu0 0.0
    %431 = vmatpush2.msra.mxu0 0.0
    %432 = vmatprep.subr.mxu0 0.0
    %433 = vmatpush2.msra.mxu0 0.0
    %434 = vmatprep.subr.mxu0 0.0
    %435 = vmatpush2.msra.mxu0 0.0
    %436 = vmatprep.subr.mxu0 0.0
    %437 = vmatpush2.msra.mxu0 0.0
    %438 = vmatprep.subr.mxu0 0.0
    %439 = vmatpush2.msra.mxu0 0.0
    %440 = vmatprep.subr.mxu0 0.0
    %441 = vmatpush2.msra.mxu0 0.0
    %442 = vmatprep.subr.mxu0 0.0
    %443 = vmatpush2.msra.mxu0 0.0
    %444 = vmatprep.subr.mxu0 0.0
    %445 = vmatpush2.msra.mxu0 0.0
    %446 = vmatprep.subr.mxu0 0.0
    %447 = vmatpush2.msra.mxu0 0.0
    %448 = vmatprep.mubr.f32.mxu0 0.0
    %449 = vmatmul.mubr.f32.gmra.mxu0 %v382
    %v450 = vpop.f32.mrf.mxu0
    %v451 = vadd.f32 0.0, %v450
    %v452 = vpop.f32.mrf.mxu0
    %453 = vdwg.mxu0
    %v454 = vadd.f32 %v378, %v451
    %455 = vst [vmem:[#allocation2 + $0x20] sm:$0xff] %v454
    %v456 = vld [vmem:[#allocation2 + $0x20] sm:$0xff]
    %v457 = vld [vmem:[#allocation11] sm:$0xff]
    %v458 = vld [vmem:[#allocation2 + $0x18] sm:$0xff]
    %v460 = vsel %vm302, %v457, 0
    %462 = vmatprep.subr.mxu0 0.0
    %463 = vmatpush1.msra.mxu0 0.0
    %464 = vmatprep.subr.mxu0 0.0
    %465 = vmatpush1.msra.mxu0 0.0
    %466 = vmatprep.subr.mxu0 0.0
    %467 = vmatpush1.msra.mxu0 0.0
    %468 = vmatprep.subr.mxu0 0.0
    %469 = vmatpush1.msra.mxu0 0.0
    %470 = vmatprep.subr.mxu0 0.0
    %471 = vmatpush1.msra.mxu0 0.0
    %472 = vmatprep.subr.mxu0 0.0
    %473 = vmatpush1.msra.mxu0 0.0
    %474 = vmatprep.subr.mxu0 0.0
    %475 = vmatpush1.msra.mxu0 0.0
    %476 = vmatprep.subr.mxu0 0.0
    %477 = vmatpush1.msra.mxu0 0.0
    %478 = vmatprep.subr.mxu0 0.0
    %479 = vmatpush1.msra.mxu0 0.0
    %480 = vmatprep.subr.mxu0 0.0
    %481 = vmatpush1.msra.mxu0 0.0
    %482 = vmatprep.subr.mxu0 0.0
    %483 = vmatpush1.msra.mxu0 0.0
    %484 = vmatprep.subr.mxu0 0.0
    %485 = vmatpush1.msra.mxu0 0.0
    %486 = vmatprep.subr.mxu0 0.0
    %487 = vmatpush1.msra.mxu0 0.0
    %488 = vmatprep.subr.mxu0 0.0
    %489 = vmatpush1.msra.mxu0 0.0
    %490 = vmatprep.subr.mxu0 0.0
    %491 = vmatpush1.msra.mxu0 0.0
    %492 = vmatprep.subr.mxu0 0.0
    %493 = vmatpush1.msra.mxu0 %v458
    %494 = vmatprep.subr.mxu0 0.0
    %495 = vmatpush2.msra.mxu0 0.0
    %496 = vmatprep.subr.mxu0 0.0
    %497 = vmatpush2.msra.mxu0 0.0
    %498 = vmatprep.subr.mxu0 0.0
    %499 = vmatpush2.msra.mxu0 0.0
    %500 = vmatprep.subr.mxu0 0.0
    %501 = vmatpush2.msra.mxu0 0.0
    %502 = vmatprep.subr.mxu0 0.0
    %503 = vmatpush2.msra.mxu0 0.0
    %504 = vmatprep.subr.mxu0 0.0
    %505 = vmatpush2.msra.mxu0 0.0
    %506 = vmatprep.subr.mxu0 0.0
    %507 = vmatpush2.msra.mxu0 0.0
    %508 = vmatprep.subr.mxu0 0.0
    %509 = vmatpush2.msra.mxu0 0.0
    %510 = vmatprep.subr.mxu0 0.0
    %511 = vmatpush2.msra.mxu0 0.0
    %512 = vmatprep.subr.mxu0 0.0
    %513 = vmatpush2.msra.mxu0 0.0
    %514 = vmatprep.subr.mxu0 0.0
    %515 = vmatpush2.msra.mxu0 0.0
    %516 = vmatprep.subr.mxu0 0.0
    %517 = vmatpush2.msra.mxu0 0.0
    %518 = vmatprep.subr.mxu0 0.0
    %519 = vmatpush2.msra.mxu0 0.0
    %520 = vmatprep.subr.mxu0 0.0
    %521 = vmatpush2.msra.mxu0 0.0
    %522 = vmatprep.subr.mxu0 0.0
    %523 = vmatpush2.msra.mxu0 0.0
    %524 = vmatprep.subr.mxu0 0.0
    %525 = vmatpush2.msra.mxu0 0.0
    %526 = vmatprep.mubr.f32.mxu0 0.0
    %527 = vmatmul.mubr.f32.gmra.mxu0 %v460
    %v528 = vpop.f32.mrf.mxu0
    %v529 = vadd.f32 0.0, %v528
    %v530 = vpop.f32.mrf.mxu0
    %531 = vdwg.mxu0
    %v532 = vadd.f32 %v456, %v529
    %533 = vst [vmem:[#allocation2 + $0x20] sm:$0xff] %v532
    %v534 = vld [vmem:[#allocation2 + $0x28] sm:$0xff]
    %v535 = vld [vmem:[%s5] sm:$0xff]
    %v536 = vld [vmem:[#allocation2 + $0x8] sm:$0xff]
    %v538 = vsel %vm302, %v535, 0
    %540 = vmatprep.subr.mxu0 0.0
    %541 = vmatpush1.msra.mxu0 0.0
    %542 = vmatprep.subr.mxu0 0.0
    %543 = vmatpush1.msra.mxu0 0.0
    %544 = vmatprep.subr.mxu0 0.0
    %545 = vmatpush1.msra.mxu0 0.0
    %546 = vmatprep.subr.mxu0 0.0
    %547 = vmatpush1.msra.mxu0 0.0
    %548 = vmatprep.subr.mxu0 0.0
    %549 = vmatpush1.msra.mxu0 0.0
    %550 = vmatprep.subr.mxu0 0.0
    %551 = vmatpush1.msra.mxu0 0.0
    %552 = vmatprep.subr.mxu0 0.0
    %553 = vmatpush1.msra.mxu0 0.0
    %554 = vmatprep.subr.mxu0 0.0
    %555 = vmatpush1.msra.mxu0 0.0
    %556 = vmatprep.subr.mxu0 0.0
    %557 = vmatpush1.msra.mxu0 0.0
    %558 = vmatprep.subr.mxu0 0.0
    %559 = vmatpush1.msra.mxu0 0.0
    %560 = vmatprep.subr.mxu0 0.0
    %561 = vmatpush1.msra.mxu0 0.0
    %562 = vmatprep.subr.mxu0 0.0
    %563 = vmatpush1.msra.mxu0 0.0
    %564 = vmatprep.subr.mxu0 0.0
    %565 = vmatpush1.msra.mxu0 0.0
    %566 = vmatprep.subr.mxu0 0.0
    %567 = vmatpush1.msra.mxu0 0.0
    %568 = vmatprep.subr.mxu0 0.0
    %569 = vmatpush1.msra.mxu0 0.0
    %570 = vmatprep.subr.mxu0 0.0
    %571 = vmatpush1.msra.mxu0 %v536
    %572 = vmatprep.subr.mxu0 0.0
    %573 = vmatpush2.msra.mxu0 0.0
    %574 = vmatprep.subr.mxu0 0.0
    %575 = vmatpush2.msra.mxu0 0.0
    %576 = vmatprep.subr.mxu0 0.0
    %577 = vmatpush2.msra.mxu0 0.0
    %578 = vmatprep.subr.mxu0 0.0
    %579 = vmatpush2.msra.mxu0 0.0
    %580 = vmatprep.subr.mxu0 0.0
    %581 = vmatpush2.msra.mxu0 0.0
    %582 = vmatprep.subr.mxu0 0.0
    %583 = vmatpush2.msra.mxu0 0.0
    %584 = vmatprep.subr.mxu0 0.0
    %585 = vmatpush2.msra.mxu0 0.0
    %586 = vmatprep.subr.mxu0 0.0
    %587 = vmatpush2.msra.mxu0 0.0
    %588 = vmatprep.subr.mxu0 0.0
    %589 = vmatpush2.msra.mxu0 0.0
    %590 = vmatprep.subr.mxu0 0.0
    %591 = vmatpush2.msra.mxu0 0.0
    %592 = vmatprep.subr.mxu0 0.0
    %593 = vmatpush2.msra.mxu0 0.0
    %594 = vmatprep.subr.mxu0 0.0
    %595 = vmatpush2.msra.mxu0 0.0
    %596 = vmatprep.subr.mxu0 0.0
    %597 = vmatpush2.msra.mxu0 0.0
    %598 = vmatprep.subr.mxu0 0.0
    %599 = vmatpush2.msra.mxu0 0.0
    %600 = vmatprep.subr.mxu0 0.0
    %601 = vmatpush2.msra.mxu0 0.0
    %602 = vmatprep.subr.mxu0 0.0
    %603 = vmatpush2.msra.mxu0 0.0
    %604 = vmatprep.mubr.f32.mxu0 0.0
    %605 = vmatmul.mubr.f32.gmra.mxu0 %v538
    %v606 = vpop.f32.mrf.mxu0
    %v607 = vadd.f32 0.0, %v606
    %v608 = vpop.f32.mrf.mxu0
    %609 = vdwg.mxu0
    %v610 = vadd.f32 %v534, %v607
    %611 = vst [vmem:[#allocation2 + $0x28] sm:$0xff] %v610
    %v612 = vld [vmem:[#allocation2 + $0x28] sm:$0xff]
    %v613 = vld [vmem:[#allocation12] sm:$0xff]
    %v614 = vld [vmem:[#allocation2 + $0x20] sm:$0xff]
    %v616 = vsel %vm302, %v613, 0
    %618 = vmatprep.subr.mxu0 0.0
    %619 = vmatpush1.msra.mxu0 0.0
    %620 = vmatprep.subr.mxu0 0.0
    %621 = vmatpush1.msra.mxu0 0.0
    %622 = vmatprep.subr.mxu0 0.0
    %623 = vmatpush1.msra.mxu0 0.0
    %624 = vmatprep.subr.mxu0 0.0
    %625 = vmatpush1.msra.mxu0 0.0
    %626 = vmatprep.subr.mxu0 0.0
    %627 = vmatpush1.msra.mxu0 0.0
    %628 = vmatprep.subr.mxu0 0.0
    %629 = vmatpush1.msra.mxu0 0.0
    %630 = vmatprep.subr.mxu0 0.0
    %631 = vmatpush1.msra.mxu0 0.0
    %632 = vmatprep.subr.mxu0 0.0
    %633 = vmatpush1.msra.mxu0 0.0
    %634 = vmatprep.subr.mxu0 0.0
    %635 = vmatpush1.msra.mxu0 0.0
    %636 = vmatprep.subr.mxu0 0.0
    %637 = vmatpush1.msra.mxu0 0.0
    %638 = vmatprep.subr.mxu0 0.0
    %639 = vmatpush1.msra.mxu0 0.0
    %640 = vmatprep.subr.mxu0 0.0
    %641 = vmatpush1.msra.mxu0 0.0
    %642 = vmatprep.subr.mxu0 0.0
    %643 = vmatpush1.msra.mxu0 0.0
    %644 = vmatprep.subr.mxu0 0.0
    %645 = vmatpush1.msra.mxu0 0.0
    %646 = vmatprep.subr.mxu0 0.0
    %647 = vmatpush1.msra.mxu0 0.0
    %648 = vmatprep.subr.mxu0 0.0
    %649 = vmatpush1.msra.mxu0 %v614
    %650 = vmatprep.subr.mxu0 0.0
    %651 = vmatpush2.msra.mxu0 0.0
    %652 = vmatprep.subr.mxu0 0.0
    %653 = vmatpush2.msra.mxu0 0.0
    %654 = vmatprep.subr.mxu0 0.0
    %655 = vmatpush2.msra.mxu0 0.0
    %656 = vmatprep.subr.mxu0 0.0
    %657 = vmatpush2.msra.mxu0 0.0
    %658 = vmatprep.subr.mxu0 0.0
    %659 = vmatpush2.msra.mxu0 0.0
    %660 = vmatprep.subr.mxu0 0.0
    %661 = vmatpush2.msra.mxu0 0.0
    %662 = vmatprep.subr.mxu0 0.0
    %663 = vmatpush2.msra.mxu0 0.0
    %664 = vmatprep.subr.mxu0 0.0
    %665 = vmatpush2.msra.mxu0 0.0
    %666 = vmatprep.subr.mxu0 0.0
    %667 = vmatpush2.msra.mxu0 0.0
    %668 = vmatprep.subr.mxu0 0.0
    %669 = vmatpush2.msra.mxu0 0.0
    %670 = vmatprep.subr.mxu0 0.0
    %671 = vmatpush2.msra.mxu0 0.0
    %672 = vmatprep.subr.mxu0 0.0
    %673 = vmatpush2.msra.mxu0 0.0
    %674 = vmatprep.subr.mxu0 0.0
    %675 = vmatpush2.msra.mxu0 0.0
    %676 = vmatprep.subr.mxu0 0.0
    %677 = vmatpush2.msra.mxu0 0.0
    %678 = vmatprep.subr.mxu0 0.0
    %679 = vmatpush2.msra.mxu0 0.0
    %680 = vmatprep.subr.mxu0 0.0
    %681 = vmatpush2.msra.mxu0 0.0
    %682 = vmatprep.mubr.f32.mxu0 0.0
    %683 = vmatmul.mubr.f32.gmra.mxu0 %v616
    %v684 = vpop.f32.mrf.mxu0
    %v685 = vadd.f32 0.0, %v684
    %v686 = vpop.f32.mrf.mxu0
    %687 = vdwg.mxu0
    %v688 = vadd.f32 %v612, %v685
    %689 = vst [vmem:[#allocation2 + $0x28] sm:$0xff] %v688
    %v690 = vld [vmem:[#allocation14] sm:$0xff]
    %v691 = vld [vmem:[#allocation2] sm:$0xff]
    %v693 = vsel %vm302, %v690, 0
    %695 = vmatprep.subr.mxu0 0.0
    %696 = vmatpush1.msra.mxu0 0.0
    %697 = vmatprep.subr.mxu0 0.0
    %698 = vmatpush1.msra.mxu0 0.0
    %699 = vmatprep.subr.mxu0 0.0
    %700 = vmatpush1.msra.mxu0 0.0
    %701 = vmatprep.subr.mxu0 0.0
    %702 = vmatpush1.msra.mxu0 0.0
    %703 = vmatprep.subr.mxu0 0.0
    %704 = vmatpush1.msra.mxu0 0.0
    %705 = vmatprep.subr.mxu0 0.0
    %706 = vmatpush1.msra.mxu0 0.0
    %707 = vmatprep.subr.mxu0 0.0
    %708 = vmatpush1.msra.mxu0 0.0
    %709 = vmatprep.subr.mxu0 0.0
    %710 = vmatpush1.msra.mxu0 0.0
    %711 = vmatprep.subr.mxu0 0.0
    %712 = vmatpush1.msra.mxu0 0.0
    %713 = vmatprep.subr.mxu0 0.0
    %714 = vmatpush1.msra.mxu0 0.0
    %715 = vmatprep.subr.mxu0 0.0
    %716 = vmatpush1.msra.mxu0 0.0
    %717 = vmatprep.subr.mxu0 0.0
    %718 = vmatpush1.msra.mxu0 0.0
    %719 = vmatprep.subr.mxu0 0.0
    %720 = vmatpush1.msra.mxu0 0.0
    %721 = vmatprep.subr.mxu0 0.0
    %722 = vmatpush1.msra.mxu0 0.0
    %723 = vmatprep.subr.mxu0 0.0
    %724 = vmatpush1.msra.mxu0 0.0
    %725 = vmatprep.subr.mxu0 0.0
    %726 = vmatpush1.msra.mxu0 %v691
    %727 = vmatprep.subr.mxu0 0.0
    %728 = vmatpush2.msra.mxu0 0.0
    %729 = vmatprep.subr.mxu0 0.0
    %730 = vmatpush2.msra.mxu0 0.0
    %731 = vmatprep.subr.mxu0 0.0
    %732 = vmatpush2.msra.mxu0 0.0
    %733 = vmatprep.subr.mxu0 0.0
    %734 = vmatpush2.msra.mxu0 0.0
    %735 = vmatprep.subr.mxu0 0.0
    %736 = vmatpush2.msra.mxu0 0.0
    %737 = vmatprep.subr.mxu0 0.0
    %738 = vmatpush2.msra.mxu0 0.0
    %739 = vmatprep.subr.mxu0 0.0
    %740 = vmatpush2.msra.mxu0 0.0
    %741 = vmatprep.subr.mxu0 0.0
    %742 = vmatpush2.msra.mxu0 0.0
    %743 = vmatprep.subr.mxu0 0.0
    %744 = vmatpush2.msra.mxu0 0.0
    %745 = vmatprep.subr.mxu0 0.0
    %746 = vmatpush2.msra.mxu0 0.0
    %747 = vmatprep.subr.mxu0 0.0
    %748 = vmatpush2.msra.mxu0 0.0
    %749 = vmatprep.subr.mxu0 0.0
    %750 = vmatpush2.msra.mxu0 0.0
    %751 = vmatprep.subr.mxu0 0.0
    %752 = vmatpush2.msra.mxu0 0.0
    %753 = vmatprep.subr.mxu0 0.0
    %754 = vmatpush2.msra.mxu0 0.0
    %755 = vmatprep.subr.mxu0 0.0
    %756 = vmatpush2.msra.mxu0 0.0
    %757 = vmatprep.subr.mxu0 0.0
    %758 = vmatpush2.msra.mxu0 0.0
    %759 = vmatprep.mubr.f32.mxu0 0.0
    %760 = vmatmul.mubr.f32.gmra.mxu0 %v693
    %v761 = vpop.f32.mrf.mxu0
    %v762 = vadd.f32 0.0, %v761
    %v763 = vpop.f32.mrf.mxu0
    %764 = vdwg.mxu0
    %v765 = vld [vmem:[#allocation15] sm:$0xff]
    %v766 = vld [vmem:[#allocation2 + $0x8] sm:$0xff]
    %v768 = vsel %vm302, %v765, 0
    %770 = vmatprep.subr.mxu0 0.0
    %771 = vmatpush1.msra.mxu0 0.0
    %772 = vmatprep.subr.mxu0 0.0
    %773 = vmatpush1.msra.mxu0 0.0
    %774 = vmatprep.subr.mxu0 0.0
    %775 = vmatpush1.msra.mxu0 0.0
    %776 = vmatprep.subr.mxu0 0.0
    %777 = vmatpush1.msra.mxu0 0.0
    %778 = vmatprep.subr.mxu0 0.0
    %779 = vmatpush1.msra.mxu0 0.0
    %780 = vmatprep.subr.mxu0 0.0
    %781 = vmatpush1.msra.mxu0 0.0
    %782 = vmatprep.subr.mxu0 0.0
    %783 = vmatpush1.msra.mxu0 0.0
    %784 = vmatprep.subr.mxu0 0.0
    %785 = vmatpush1.msra.mxu0 0.0
    %786 = vmatprep.subr.mxu0 0.0
    %787 = vmatpush1.msra.mxu0 0.0
    %788 = vmatprep.subr.mxu0 0.0
    %789 = vmatpush1.msra.mxu0 0.0
    %790 = vmatprep.subr.mxu0 0.0
    %791 = vmatpush1.msra.mxu0 0.0
    %792 = vmatprep.subr.mxu0 0.0
    %793 = vmatpush1.msra.mxu0 0.0
    %794 = vmatprep.subr.mxu0 0.0
    %795 = vmatpush1.msra.mxu0 0.0
    %796 = vmatprep.subr.mxu0 0.0
    %797 = vmatpush1.msra.mxu0 0.0
    %798 = vmatprep.subr.mxu0 0.0
    %799 = vmatpush1.msra.mxu0 0.0
    %800 = vmatprep.subr.mxu0 0.0
    %801 = vmatpush1.msra.mxu0 %v766
    %802 = vmatprep.subr.mxu0 0.0
    %803 = vmatpush2.msra.mxu0 0.0
    %804 = vmatprep.subr.mxu0 0.0
    %805 = vmatpush2.msra.mxu0 0.0
    %806 = vmatprep.subr.mxu0 0.0
    %807 = vmatpush2.msra.mxu0 0.0
    %808 = vmatprep.subr.mxu0 0.0
    %809 = vmatpush2.msra.mxu0 0.0
    %810 = vmatprep.subr.mxu0 0.0
    %811 = vmatpush2.msra.mxu0 0.0
    %812 = vmatprep.subr.mxu0 0.0
    %813 = vmatpush2.msra.mxu0 0.0
    %814 = vmatprep.subr.mxu0 0.0
    %815 = vmatpush2.msra.mxu0 0.0
    %816 = vmatprep.subr.mxu0 0.0
    %817 = vmatpush2.msra.mxu0 0.0
    %818 = vmatprep.subr.mxu0 0.0
    %819 = vmatpush2.msra.mxu0 0.0
    %820 = vmatprep.subr.mxu0 0.0
    %821 = vmatpush2.msra.mxu0 0.0
    %822 = vmatprep.subr.mxu0 0.0
    %823 = vmatpush2.msra.mxu0 0.0
    %824 = vmatprep.subr.mxu0 0.0
    %825 = vmatpush2.msra.mxu0 0.0
    %826 = vmatprep.subr.mxu0 0.0
    %827 = vmatpush2.msra.mxu0 0.0
    %828 = vmatprep.subr.mxu0 0.0
    %829 = vmatpush2.msra.mxu0 0.0
    %830 = vmatprep.subr.mxu0 0.0
    %831 = vmatpush2.msra.mxu0 0.0
    %832 = vmatprep.subr.mxu0 0.0
    %833 = vmatpush2.msra.mxu0 0.0
    %834 = vmatprep.mubr.f32.mxu0 0.0
    %835 = vmatmul.mubr.f32.gmra.mxu0 %v768
    %v836 = vpop.f32.mrf.mxu0
    %v837 = vadd.f32 0.0, %v836
    %v838 = vpop.f32.mrf.mxu0
    %839 = vdwg.mxu0
    %v840 = vmax.f32 %v762, %v837
    %v841 = vld [vmem:[%s9] sm:$0xff]
    %v842 = vld [vmem:[#allocation2 + $0x10] sm:$0xff]
    %v844 = vsel %vm302, %v841, 0
    %846 = vmatprep.subr.mxu0 0.0
    %847 = vmatpush1.msra.mxu0 0.0
    %848 = vmatprep.subr.mxu0 0.0
    %849 = vmatpush1.msra.mxu0 0.0
    %850 = vmatprep.subr.mxu0 0.0
    %851 = vmatpush1.msra.mxu0 0.0
    %852 = vmatprep.subr.mxu0 0.0
    %853 = vmatpush1.msra.mxu0 0.0
    %854 = vmatprep.subr.mxu0 0.0
    %855 = vmatpush1.msra.mxu0 0.0
    %856 = vmatprep.subr.mxu0 0.0
    %857 = vmatpush1.msra.mxu0 0.0
    %858 = vmatprep.subr.mxu0 0.0
    %859 = vmatpush1.msra.mxu0 0.0
    %860 = vmatprep.subr.mxu0 0.0
    %861 = vmatpush1.msra.mxu0 0.0
    %862 = vmatprep.subr.mxu0 0.0
    %863 = vmatpush1.msra.mxu0 0.0
    %864 = vmatprep.subr.mxu0 0.0
    %865 = vmatpush1.msra.mxu0 0.0
    %866 = vmatprep.subr.mxu0 0.0
    %867 = vmatpush1.msra.mxu0 0.0
    %868 = vmatprep.subr.mxu0 0.0
    %869 = vmatpush1.msra.mxu0 0.0
    %870 = vmatprep.subr.mxu0 0.0
    %871 = vmatpush1.msra.mxu0 0.0
    %872 = vmatprep.subr.mxu0 0.0
    %873 = vmatpush1.msra.mxu0 0.0
    %874 = vmatprep.subr.mxu0 0.0
    %875 = vmatpush1.msra.mxu0 0.0
    %876 = vmatprep.subr.mxu0 0.0
    %877 = vmatpush1.msra.mxu0 %v842
    %878 = vmatprep.subr.mxu0 0.0
    %879 = vmatpush2.msra.mxu0 0.0
    %880 = vmatprep.subr.mxu0 0.0
    %881 = vmatpush2.msra.mxu0 0.0
    %882 = vmatprep.subr.mxu0 0.0
    %883 = vmatpush2.msra.mxu0 0.0
    %884 = vmatprep.subr.mxu0 0.0
    %885 = vmatpush2.msra.mxu0 0.0
    %886 = vmatprep.subr.mxu0 0.0
    %887 = vmatpush2.msra.mxu0 0.0
    %888 = vmatprep.subr.mxu0 0.0
    %889 = vmatpush2.msra.mxu0 0.0
    %890 = vmatprep.subr.mxu0 0.0
    %891 = vmatpush2.msra.mxu0 0.0
    %892 = vmatprep.subr.mxu0 0.0
    %893 = vmatpush2.msra.mxu0 0.0
    %894 = vmatprep.subr.mxu0 0.0
    %895 = vmatpush2.msra.mxu0 0.0
    %896 = vmatprep.subr.mxu0 0.0
    %897 = vmatpush2.msra.mxu0 0.0
    %898 = vmatprep.subr.mxu0 0.0
    %899 = vmatpush2.msra.mxu0 0.0
    %900 = vmatprep.subr.mxu0 0.0
    %901 = vmatpush2.msra.mxu0 0.0
    %902 = vmatprep.subr.mxu0 0.0
    %903 = vmatpush2.msra.mxu0 0.0
    %904 = vmatprep.subr.mxu0 0.0
    %905 = vmatpush2.msra.mxu0 0.0
    %906 = vmatprep.subr.mxu0 0.0
    %907 = vmatpush2.msra.mxu0 0.0
    %908 = vmatprep.subr.mxu0 0.0
    %909 = vmatpush2.msra.mxu0 0.0
    %910 = vmatprep.mubr.f32.mxu0 0.0
    %911 = vmatmul.mubr.f32.gmra.mxu0 %v844
    %v912 = vpop.f32.mrf.mxu0
    %v913 = vadd.f32 0.0, %v912
    %v914 = vpop.f32.mrf.mxu0
    %915 = vdwg.mxu0
    %v916 = vmax.f32 %v840, %v913
    %v917 = vld [vmem:[#allocation17] sm:$0xff]
    %v918 = vld [vmem:[#allocation2 + $0x18] sm:$0xff]
    %v920 = vsel %vm302, %v917, 0
    %922 = vmatprep.subr.mxu0 0.0
    %923 = vmatpush1.msra.mxu0 0.0
    %924 = vmatprep.subr.mxu0 0.0
    %925 = vmatpush1.msra.mxu0 0.0
    %926 = vmatprep.subr.mxu0 0.0
    %927 = vmatpush1.msra.mxu0 0.0
    %928 = vmatprep.subr.mxu0 0.0
    %929 = vmatpush1.msra.mxu0 0.0
    %930 = vmatprep.subr.mxu0 0.0
    %931 = vmatpush1.msra.mxu0 0.0
    %932 = vmatprep.subr.mxu0 0.0
    %933 = vmatpush1.msra.mxu0 0.0
    %934 = vmatprep.subr.mxu0 0.0
    %935 = vmatpush1.msra.mxu0 0.0
    %936 = vmatprep.subr.mxu0 0.0
    %937 = vmatpush1.msra.mxu0 0.0
    %938 = vmatprep.subr.mxu0 0.0
    %939 = vmatpush1.msra.mxu0 0.0
    %940 = vmatprep.subr.mxu0 0.0
    %941 = vmatpush1.msra.mxu0 0.0
    %942 = vmatprep.subr.mxu0 0.0
    %943 = vmatpush1.msra.mxu0 0.0
    %944 = vmatprep.subr.mxu0 0.0
    %945 = vmatpush1.msra.mxu0 0.0
    %946 = vmatprep.subr.mxu0 0.0
    %947 = vmatpush1.msra.mxu0 0.0
    %948 = vmatprep.subr.mxu0 0.0
    %949 = vmatpush1.msra.mxu0 0.0
    %950 = vmatprep.subr.mxu0 0.0
    %951 = vmatpush1.msra.mxu0 0.0
    %952 = vmatprep.subr.mxu0 0.0
    %953 = vmatpush1.msra.mxu0 %v918
    %954 = vmatprep.subr.mxu0 0.0
    %955 = vmatpush2.msra.mxu0 0.0
    %956 = vmatprep.subr.mxu0 0.0
    %957 = vmatpush2.msra.mxu0 0.0
    %958 = vmatprep.subr.mxu0 0.0
    %959 = vmatpush2.msra.mxu0 0.0
    %960 = vmatprep.subr.mxu0 0.0
    %961 = vmatpush2.msra.mxu0 0.0
    %962 = vmatprep.subr.mxu0 0.0
    %963 = vmatpush2.msra.mxu0 0.0
    %964 = vmatprep.subr.mxu0 0.0
    %965 = vmatpush2.msra.mxu0 0.0
    %966 = vmatprep.subr.mxu0 0.0
    %967 = vmatpush2.msra.mxu0 0.0
    %968 = vmatprep.subr.mxu0 0.0
    %969 = vmatpush2.msra.mxu0 0.0
    %970 = vmatprep.subr.mxu0 0.0
    %971 = vmatpush2.msra.mxu0 0.0
    %972 = vmatprep.subr.mxu0 0.0
    %973 = vmatpush2.msra.mxu0 0.0
    %974 = vmatprep.subr.mxu0 0.0
    %975 = vmatpush2.msra.mxu0 0.0
    %976 = vmatprep.subr.mxu0 0.0
    %977 = vmatpush2.msra.mxu0 0.0
    %978 = vmatprep.subr.mxu0 0.0
    %979 = vmatpush2.msra.mxu0 0.0
    %980 = vmatprep.subr.mxu0 0.0
    %981 = vmatpush2.msra.mxu0 0.0
    %982 = vmatprep.subr.mxu0 0.0
    %983 = vmatpush2.msra.mxu0 0.0
    %984 = vmatprep.subr.mxu0 0.0
    %985 = vmatpush2.msra.mxu0 0.0
    %986 = vmatprep.mubr.f32.mxu0 0.0
    %987 = vmatmul.mubr.f32.gmra.mxu0 %v920
    %v988 = vpop.f32.mrf.mxu0
    %v989 = vadd.f32 0.0, %v988
    %v990 = vpop.f32.mrf.mxu0
    %991 = vdwg.mxu0
    %v992 = vmax.f32 %v916, %v989
    %v993 = vld [vmem:[#allocation18] sm:$0xff]
    %v994 = vld [vmem:[#allocation2 + $0x20] sm:$0xff]
    %v996 = vsel %vm302, %v993, 0
    %998 = vmatprep.subr.mxu0 0.0
    %999 = vmatpush1.msra.mxu0 0.0
    %1000 = vmatprep.subr.mxu0 0.0
    %1001 = vmatpush1.msra.mxu0 0.0
    %1002 = vmatprep.subr.mxu0 0.0
    %1003 = vmatpush1.msra.mxu0 0.0
    %1004 = vmatprep.subr.mxu0 0.0
    %1005 = vmatpush1.msra.mxu0 0.0
    %1006 = vmatprep.subr.mxu0 0.0
    %1007 = vmatpush1.msra.mxu0 0.0
    %1008 = vmatprep.subr.mxu0 0.0
    %1009 = vmatpush1.msra.mxu0 0.0
    %1010 = vmatprep.subr.mxu0 0.0
    %1011 = vmatpush1.msra.mxu0 0.0
    %1012 = vmatprep.subr.mxu0 0.0
    %1013 = vmatpush1.msra.mxu0 0.0
    %1014 = vmatprep.subr.mxu0 0.0
    %1015 = vmatpush1.msra.mxu0 0.0
    %1016 = vmatprep.subr.mxu0 0.0
    %1017 = vmatpush1.msra.mxu0 0.0
    %1018 = vmatprep.subr.mxu0 0.0
    %1019 = vmatpush1.msra.mxu0 0.0
    %1020 = vmatprep.subr.mxu0 0.0
    %1021 = vmatpush1.msra.mxu0 0.0
    %1022 = vmatprep.subr.mxu0 0.0
    %1023 = vmatpush1.msra.mxu0 0.0
    %1024 = vmatprep.subr.mxu0 0.0
    %1025 = vmatpush1.msra.mxu0 0.0
    %1026 = vmatprep.subr.mxu0 0.0
    %1027 = vmatpush1.msra.mxu0 0.0
    %1028 = vmatprep.subr.mxu0 0.0
    %1029 = vmatpush1.msra.mxu0 %v994
    %1030 = vmatprep.subr.mxu0 0.0
    %1031 = vmatpush2.msra.mxu0 0.0
    %1032 = vmatprep.subr.mxu0 0.0
    %1033 = vmatpush2.msra.mxu0 0.0
    %1034 = vmatprep.subr.mxu0 0.0
    %1035 = vmatpush2.msra.mxu0 0.0
    %1036 = vmatprep.subr.mxu0 0.0
    %1037 = vmatpush2.msra.mxu0 0.0
    %1038 = vmatprep.subr.mxu0 0.0
    %1039 = vmatpush2.msra.mxu0 0.0
    %1040 = vmatprep.subr.mxu0 0.0
    %1041 = vmatpush2.msra.mxu0 0.0
    %1042 = vmatprep.subr.mxu0 0.0
    %1043 = vmatpush2.msra.mxu0 0.0
    %1044 = vmatprep.subr.mxu0 0.0
    %1045 = vmatpush2.msra.mxu0 0.0
    %1046 = vmatprep.subr.mxu0 0.0
    %1047 = vmatpush2.msra.mxu0 0.0
    %1048 = vmatprep.subr.mxu0 0.0
    %1049 = vmatpush2.msra.mxu0 0.0
    %1050 = vmatprep.subr.mxu0 0.0
    %1051 = vmatpush2.msra.mxu0 0.0
    %1052 = vmatprep.subr.mxu0 0.0
    %1053 = vmatpush2.msra.mxu0 0.0
    %1054 = vmatprep.subr.mxu0 0.0
    %1055 = vmatpush2.msra.mxu0 0.0
    %1056 = vmatprep.subr.mxu0 0.0
    %1057 = vmatpush2.msra.mxu0 0.0
    %1058 = vmatprep.subr.mxu0 0.0
    %1059 = vmatpush2.msra.mxu0 0.0
    %1060 = vmatprep.subr.mxu0 0.0
    %1061 = vmatpush2.msra.mxu0 0.0
    %1062 = vmatprep.mubr.f32.mxu0 0.0
    %1063 = vmatmul.mubr.f32.gmra.mxu0 %v996
    %v1064 = vpop.f32.mrf.mxu0
    %v1065 = vadd.f32 0.0, %v1064
    %v1066 = vpop.f32.mrf.mxu0
    %1067 = vdwg.mxu0
    %v1068 = vmax.f32 %v992, %v1065
    %v1069 = vld [vmem:[#allocation20] sm:$0xff]
    %v1070 = vld [vmem:[#allocation2 + $0x28] sm:$0xff]
    %v1072 = vsel %vm302, %v1069, 0
    %1074 = vmatprep.subr.mxu0 0.0
    %1075 = vmatpush1.msra.mxu0 0.0
    %1076 = vmatprep.subr.mxu0 0.0
    %1077 = vmatpush1.msra.mxu0 0.0
    %1078 = vmatprep.subr.mxu0 0.0
    %1079 = vmatpush1.msra.mxu0 0.0
    %1080 = vmatprep.subr.mxu0 0.0
    %1081 = vmatpush1.msra.mxu0 0.0
    %1082 = vmatprep.subr.mxu0 0.0
    %1083 = vmatpush1.msra.mxu0 0.0
    %1084 = vmatprep.subr.mxu0 0.0
    %1085 = vmatpush1.msra.mxu0 0.0
    %1086 = vmatprep.subr.mxu0 0.0
    %1087 = vmatpush1.msra.mxu0 0.0
    %1088 = vmatprep.subr.mxu0 0.0
    %1089 = vmatpush1.msra.mxu0 0.0
    %1090 = vmatprep.subr.mxu0 0.0
    %1091 = vmatpush1.msra.mxu0 0.0
    %1092 = vmatprep.subr.mxu0 0.0
    %1093 = vmatpush1.msra.mxu0 0.0
    %1094 = vmatprep.subr.mxu0 0.0
    %1095 = vmatpush1.msra.mxu0 0.0
    %1096 = vmatprep.subr.mxu0 0.0
    %1097 = vmatpush1.msra.mxu0 0.0
    %1098 = vmatprep.subr.mxu0 0.0
    %1099 = vmatpush1.msra.mxu0 0.0
    %1100 = vmatprep.subr.mxu0 0.0
    %1101 = vmatpush1.msra.mxu0 0.0
    %1102 = vmatprep.subr.mxu0 0.0
    %1103 = vmatpush1.msra.mxu0 0.0
    %1104 = vmatprep.subr.mxu0 0.0
    %1105 = vmatpush1.msra.mxu0 %v1070
    %1106 = vmatprep.subr.mxu0 0.0
    %1107 = vmatpush2.msra.mxu0 0.0
    %1108 = vmatprep.subr.mxu0 0.0
    %1109 = vmatpush2.msra.mxu0 0.0
    %1110 = vmatprep.subr.mxu0 0.0
    %1111 = vmatpush2.msra.mxu0 0.0
    %1112 = vmatprep.subr.mxu0 0.0
    %1113 = vmatpush2.msra.mxu0 0.0
    %1114 = vmatprep.subr.mxu0 0.0
    %1115 = vmatpush2.msra.mxu0 0.0
    %1116 = vmatprep.subr.mxu0 0.0
    %1117 = vmatpush2.msra.mxu0 0.0
    %1118 = vmatprep.subr.mxu0 0.0
    %1119 = vmatpush2.msra.mxu0 0.0
    %1120 = vmatprep.subr.mxu0 0.0
    %1121 = vmatpush2.msra.mxu0 0.0
    %1122 = vmatprep.subr.mxu0 0.0
    %1123 = vmatpush2.msra.mxu0 0.0
    %1124 = vmatprep.subr.mxu0 0.0
    %1125 = vmatpush2.msra.mxu0 0.0
    %1126 = vmatprep.subr.mxu0 0.0
    %1127 = vmatpush2.msra.mxu0 0.0
    %1128 = vmatprep.subr.mxu0 0.0
    %1129 = vmatpush2.msra.mxu0 0.0
    %1130 = vmatprep.subr.mxu0 0.0
    %1131 = vmatpush2.msra.mxu0 0.0
    %1132 = vmatprep.subr.mxu0 0.0
    %1133 = vmatpush2.msra.mxu0 0.0
    %1134 = vmatprep.subr.mxu0 0.0
    %1135 = vmatpush2.msra.mxu0 0.0
    %1136 = vmatprep.subr.mxu0 0.0
    %1137 = vmatpush2.msra.mxu0 0.0
    %1138 = vmatprep.mubr.f32.mxu0 0.0
    %1139 = vmatmul.mubr.f32.gmra.mxu0 %v1072
    %v1140 = vpop.f32.mrf.mxu0
    %v1141 = vadd.f32 0.0, %v1140
    %v1142 = vpop.f32.mrf.mxu0
    %1143 = vdwg.mxu0
    %v1144 = vmax.f32 %v1068, %v1141
    %1145 = vst [vmem:[#allocation21] sm:$0xff] %v1144
    // Predicated region
    $region98: #{tpu_custom_call.1} parent=1 // pred_check
      _
    $region99: #{tpu_custom_call.1} parent=1 // pred_check_branch
      %1147 = sbr.rel (0) target = $region101
    $region100: #{tpu_custom_call.1} parent=1 // pred_region
      %s1149 = ssub.s32 128, 128
      %1150 = vsyncadd [#allocation5], %s1149
      %s1152 = sshll.u32 [#allocation21], 4
      %s1153 = int_to_ptr.vmem [resolvable:$true] %s1152
      %1155 = dma.vmem_to_hbm [thread:$0]  %s1153, 128, %s13, [#allocation5]
    $region101: #{tpu_custom_call.1} parent=1 // pred_fallthru
      _
    // Predicated region
    $region102: #{tpu_custom_call.1} parent=1 // pred_check
      _
    $region103: #{tpu_custom_call.1} parent=1 // pred_check_branch
      %1157 = sbr.rel (0) target = $region105
    $region104: #{tpu_custom_call.1} parent=1 // pred_region
      %1158 = dma.done [#allocation5], 128
    $region105: #{tpu_custom_call.1} parent=1 // pred_fallthru
      _
    %1159 = vsyncpa [#allocation4], 1
    %1160 = vsyncpa [#allocation7], 1
    %1161 = vsyncpa [#allocation10], 1
    %1162 = vsyncpa [#allocation13], 1
    %1163 = vsyncpa [#allocation16], 1
    %1164 = vsyncpa [#allocation19], 1
    %1165 = vsyncpa [#allocation5], 1

</llo_original>
